<compile_context>
chip_gen: v7x
topology: tpu7x:2x2x1
jax: 0.10.0
libtpu: 0.0.40
codegen_flags: <defaults>
</compile_context>

<pallas_src>
import jax
import jax.numpy as jnp
from jax.experimental import pallas as pl
from jax.experimental.pallas import tpu as pltpu

# ---------------- problem sizes (AntBulletEnv-v0: obs=28, act=8) -------------
STATE = 28
ACTION = 8
H1 = 400
H2 = 300
OUT = 1


def _pad_to(n, m):
    return ((n + m - 1) // m) * m


FIN = STATE + ACTION
FIN_P = _pad_to(FIN, 128)    # 128  (padded concat(x, u) width)
H1_P = _pad_to(H1, 128)      # 512
H2_P = _pad_to(H2, 128)      # 384
OUT_P = 128                  # single lane-dense output: q1 @ lane 0, q2 @ lane 1


def _batch_tiling(B):
    """Pick the batch tile: as large as 256 rows (fills the MXU M dim), but
    shrink so large batches give >= 2 grid steps (both v7x TensorCores)."""
    Bp8 = _pad_to(max(B, 1), 8)
    tb = min(256, Bp8)
    if Bp8 >= 256 and Bp8 // tb < 2:
        tb = min(256, _pad_to((Bp8 + 1) // 2, 8))
    Bp = _pad_to(Bp8, tb)
    return tb, Bp


# ------------------------------ Pallas kernel --------------------------------
def critic_kernel(xu_ref,
                  w14_ref, b14_ref,
                  w2_ref, b2_ref,
                  w5_ref, b5_ref,
                  w36_ref, b36_ref,
                  out_ref):
    xu = xu_ref[...]                                                # bf16 (TB, FIN_P)

    # fused layer1 | layer4: one MXU matmul, f32 accumulate, f32 bias + ReLU
    hg = jnp.dot(xu, w14_ref[...], preferred_element_type=jnp.float32)
    hg = jnp.maximum(hg + b14_ref[...], 0.0).astype(jnp.bfloat16)   # (TB, 2*H1_P)

    # layer2 (Q1 head) and layer5 (Q2 head)
    h = jnp.dot(hg[:, :H1_P], w2_ref[...], preferred_element_type=jnp.float32)
    h = jnp.maximum(h + b2_ref[...], 0.0).astype(jnp.bfloat16)      # (TB, H2_P)
    g = jnp.dot(hg[:, H1_P:], w5_ref[...], preferred_element_type=jnp.float32)
    g = jnp.maximum(g + b5_ref[...], 0.0).astype(jnp.bfloat16)      # (TB, H2_P)

    # fused layer3 | layer6: single lane-dense output (q1 lane 0, q2 lane 1)
    hg2 = jnp.concatenate([h, g], axis=1)                           # (TB, 2*H2_P)
    out_ref[...] = (jnp.dot(hg2, w36_ref[...],
                            preferred_element_type=jnp.float32) + b36_ref[...])


def _rep_spec(shape):
    # weight/bias block replicated across all batch tiles
    return pl.BlockSpec(shape, lambda i: (0,) * len(shape))


# -------------------------- one-time weight packing ---------------------------
def prepare_params(params):
    """Pad, fuse-pack and cast the raw (in, out) weights ONCE (not per call).

    Returns bf16 weights / f32 biases laid out for the fused kernel:
      w14 (FIN_P, 2*H1_P), b14 (1, 2*H1_P)        - layer1 | layer4
      w2  (H1_P, H2_P),   b2  (1, H2_P)           - layer2
      w5  (H1_P, H2_P),   b5  (1, H2_P)           - layer5
      w36 (2*H2_P, OUT_P), b36 (1, OUT_P)         - layer3 (lane 0) | layer6 (lane 1)
    """
    (w1, b1, w2, b2, w3, b3, w4, b4, w5, b5, w6, b6) = params

    w14 = jnp.zeros((FIN_P, 2 * H1_P), jnp.float32)
    w14 = w14.at[:FIN, :H1].set(w1).at[:FIN, H1_P:H1_P + H1].set(w4)
    b14 = jnp.zeros((1, 2 * H1_P), jnp.float32)
    b14 = b14.at[0, :H1].set(b1.reshape(-1)).at[0, H1_P:H1_P + H1].set(b4.reshape(-1))

    def padw(a, r, c):
        return jnp.zeros((r, c), jnp.float32).at[:a.shape[0], :a.shape[1]].set(a)

    w2p = padw(w2, H1_P, H2_P)
    b2p = padw(b2.reshape(1, -1), 1, H2_P)
    w5p = padw(w5, H1_P, H2_P)
    b5p = padw(b5.reshape(1, -1), 1, H2_P)

    w36 = jnp.zeros((2 * H2_P, OUT_P), jnp.float32)
    w36 = w36.at[:H2, 0:1].set(w3).at[H2_P:H2_P + H2, 1:2].set(w6)
    b36 = jnp.zeros((1, OUT_P), jnp.float32)
    b36 = b36.at[0, 0].set(b3.reshape(-1)[0]).at[0, 1].set(b6.reshape(-1)[0])

    bf = jnp.bfloat16
    return (w14.astype(bf), b14,
            w2p.astype(bf), b2p,
            w5p.astype(bf), b5p,
            w36.astype(bf), b36)


# ------------------------------ forward wrapper -------------------------------
def _critic_forward(x, u, padded_params):
    """x: (B, STATE), u: (B, ACTION). Returns (q1, q2), each (B, 1) f32."""
    (w14, b14, w2p, b2p, w5p, b5p, w36, b36) = padded_params

    B = x.shape[0]
    tb, Bp = _batch_tiling(B)

    # Build the padded activation tile in one shot (concat + feature pad),
    # then pad the batch rows if needed; cast to bf16 for the MXU.
    xu = jnp.concatenate(
        [x.astype(jnp.float32), u.astype(jnp.float32),
         jnp.zeros((B, FIN_P - FIN), jnp.float32)], axis=1)
    if Bp > B:
        xu = jnp.pad(xu, ((0, Bp - B), (0, 0)))
    xu = xu.astype(jnp.bfloat16)

    grid = (Bp // tb,)

    out = pl.pallas_call(
        critic_kernel,
        out_shape=jax.ShapeDtypeStruct((Bp, OUT_P), jnp.float32),
        grid_spec=pltpu.PrefetchScalarGridSpec(
            num_scalar_prefetch=0,
            grid=grid,
            in_specs=[
                pl.BlockSpec((tb, FIN_P), lambda i: (i, 0)),   # xu tile
                _rep_spec((FIN_P, 2 * H1_P)), _rep_spec((1, 2 * H1_P)),
                _rep_spec((H1_P, H2_P)), _rep_spec((1, H2_P)),
                _rep_spec((H1_P, H2_P)), _rep_spec((1, H2_P)),
                _rep_spec((2 * H2_P, OUT_P)), _rep_spec((1, OUT_P)),
            ],
            out_specs=pl.BlockSpec((tb, OUT_P), lambda i: (i, 0)),
        ),
        compiler_params=pltpu.CompilerParams(
            dimension_semantics=("parallel",)),
    )(xu, w14, b14, w2p, b2p, w5p, b5p, w36, b36)

    return out[:B, 0:1], out[:B, 1:2]


critic_forward = jax.jit(_critic_forward)


# --------------------------- deterministic params ----------------------------
def init_params(key):
    """PyTorch-style uniform(-1/sqrt(fan_in), 1/sqrt(fan_in)) init, stored as
    (in, out) weights so that forward is xu @ W + b."""
    dims = [
        (FIN, H1), (H1, H2), (H2, OUT),   # layers 1-3 (Q1 head)
        (FIN, H1), (H1, H2), (H2, OUT),   # layers 4-6 (Q2 head)
    ]
    params = []
    for (fin, fout) in dims:
        key, kw, kb = jax.random.split(key, 3)
        bound = 1.0 / jnp.sqrt(float(fin))
        w = jax.random.uniform(kw, (fin, fout), jnp.float32, -bound, bound)
        b = jax.random.uniform(kb, (1, fout), jnp.float32, -bound, bound)
        params += [w, b]
    return tuple(params)


def reference_forward(x, u, params):
    (w1, b1, w2, b2, w3, b3, w4, b4, w5, b5, w6, b6) = params
    xu = jnp.concatenate([x, u], axis=1)
    h = jnp.maximum(xu @ w1 + b1, 0.0)
    h = jnp.maximum(h @ w2 + b2, 0.0)
    q1 = h @ w3 + b3
    g = jnp.maximum(xu @ w4 + b4, 0.0)
    g = jnp.maximum(g @ w5 + b5, 0.0)
    q2 = g @ w6 + b6
    return q1, q2


if __name__ == "__main__":
    key = jax.random.PRNGKey(0)
    k_params, kx, ku = jax.random.split(key, 3)

    params = init_params(k_params)
    padded_params = prepare_params(params)   # pad / fuse / cast once

    B = 8
    x = jax.random.normal(kx, (B, STATE), jnp.float32)
    u = jax.random.normal(ku, (B, ACTION), jnp.float32)

    q1, q2 = critic_forward(x, u, padded_params)
    q1 = jax.block_until_ready(q1)
    q2 = jax.block_until_ready(q2)

    r1, r2 = reference_forward(x, u, params)
    assert q1.shape == (B, 1) and q2.shape == (B, 1)
    # bf16 matmuls with f32 accumulation -> loosen tolerance vs f32 reference
    assert jnp.allclose(q1, r1, atol=5e-2, rtol=5e-2)
    assert jnp.allclose(q2, r2, atol=5e-2, rtol=5e-2)

    print("KERNEL_OK")
</pallas_src>

<mosaic_0001>
module attributes {stable_mosaic.version = 11 : i64} {
  func.func @critic_kernel(%arg0: i32, %arg1: memref<8x128xbf16, #tpu.memory_space<vmem>>, %arg2: memref<128x1024xbf16, #tpu.memory_space<vmem>>, %arg3: memref<1x1024xf32, #tpu.memory_space<vmem>>, %arg4: memref<512x384xbf16, #tpu.memory_space<vmem>>, %arg5: memref<1x384xf32, #tpu.memory_space<vmem>>, %arg6: memref<512x384xbf16, #tpu.memory_space<vmem>>, %arg7: memref<1x384xf32, #tpu.memory_space<vmem>>, %arg8: memref<768x128xbf16, #tpu.memory_space<vmem>>, %arg9: memref<1x128xf32, #tpu.memory_space<vmem>>, %arg10: memref<8x128xf32, #tpu.memory_space<vmem>>) attributes {dimension_semantics = [#tpu.dimension_semantics<parallel>], iteration_bounds = array<i64: 1>, scalar_prefetch = 0 : i64, scratch_operands = 0 : i64, tpu.core_type = #tpu.core_type<tc>, window_params = [{transform_indices = @transform_0, window_bounds = array<i64: 8, 128>}, {pipeline_mode = #tpu.pipeline_mode<synchronous>, transform_indices = @transform_1, window_bounds = array<i64: 128, 1024>}, {pipeline_mode = #tpu.pipeline_mode<synchronous>, transform_indices = @transform_2, window_bounds = array<i64: 1, 1024>}, {pipeline_mode = #tpu.pipeline_mode<synchronous>, transform_indices = @transform_3, window_bounds = array<i64: 512, 384>}, {pipeline_mode = #tpu.pipeline_mode<synchronous>, transform_indices = @transform_4, window_bounds = array<i64: 1, 384>}, {pipeline_mode = #tpu.pipeline_mode<synchronous>, transform_indices = @transform_5, window_bounds = array<i64: 512, 384>}, {pipeline_mode = #tpu.pipeline_mode<synchronous>, transform_indices = @transform_6, window_bounds = array<i64: 1, 384>}, {pipeline_mode = #tpu.pipeline_mode<synchronous>, transform_indices = @transform_7, window_bounds = array<i64: 768, 128>}, {pipeline_mode = #tpu.pipeline_mode<synchronous>, transform_indices = @transform_8, window_bounds = array<i64: 1, 128>}, {transform_indices = @transform_9, window_bounds = array<i64: 8, 128>}]} {
    %c0 = arith.constant 0 : index
    %c0_0 = arith.constant 0 : index
    %0 = vector.load %arg1[%c0, %c0_0] : memref<8x128xbf16, #tpu.memory_space<vmem>>, vector<8x128xbf16>
    %c0_1 = arith.constant 0 : index
    %c0_2 = arith.constant 0 : index
    %1 = vector.load %arg2[%c0_1, %c0_2] : memref<128x1024xbf16, #tpu.memory_space<vmem>>, vector<128x1024xbf16>
    %cst = arith.constant dense<0.000000e+00> : vector<8x1024xf32>
    %2 = tpu.matmul %0, %1, %cst {dimension_numbers = #tpu.dot_dimension_numbers<[1], [0], [0], [1], [0, 0, 1, 1], [], []>} : vector<8x128xbf16>, vector<128x1024xbf16>, vector<8x1024xf32> -> vector<8x1024xf32>
    %c0_3 = arith.constant 0 : index
    %c0_4 = arith.constant 0 : index
    %3 = vector.load %arg3[%c0_3, %c0_4] : memref<1x1024xf32, #tpu.memory_space<vmem>>, vector<1x1024xf32>
    %4 = vector.broadcast %3 : vector<1x1024xf32> to vector<8x1024xf32>
    %5 = arith.addf %2, %4 : vector<8x1024xf32>
    %cst_5 = arith.constant 0.000000e+00 : f32
    %6 = vector.broadcast %cst_5 : f32 to vector<8x1024xf32>
    %7 = arith.maximumf %5, %6 : vector<8x1024xf32>
    %8 = arith.truncf %7 : vector<8x1024xf32> to vector<8x1024xbf16>
    %9 = vector.extract_strided_slice %8 {offsets = [0, 0], sizes = [8, 512], strides = [1, 1]} : vector<8x1024xbf16> to vector<8x512xbf16>
    %c0_6 = arith.constant 0 : index
    %c0_7 = arith.constant 0 : index
    %10 = vector.load %arg4[%c0_6, %c0_7] : memref<512x384xbf16, #tpu.memory_space<vmem>>, vector<512x384xbf16>
    %cst_8 = arith.constant dense<0.000000e+00> : vector<8x384xf32>
    %11 = tpu.matmul %9, %10, %cst_8 {dimension_numbers = #tpu.dot_dimension_numbers<[1], [0], [0], [1], [0, 0, 1, 1], [], []>} : vector<8x512xbf16>, vector<512x384xbf16>, vector<8x384xf32> -> vector<8x384xf32>
    %c0_9 = arith.constant 0 : index
    %c0_10 = arith.constant 0 : index
    %12 = vector.load %arg5[%c0_9, %c0_10] : memref<1x384xf32, #tpu.memory_space<vmem>>, vector<1x384xf32>
    %13 = vector.broadcast %12 : vector<1x384xf32> to vector<8x384xf32>
    %14 = arith.addf %11, %13 : vector<8x384xf32>
    %cst_11 = arith.constant 0.000000e+00 : f32
    %15 = vector.broadcast %cst_11 : f32 to vector<8x384xf32>
    %16 = arith.maximumf %14, %15 : vector<8x384xf32>
    %17 = arith.truncf %16 : vector<8x384xf32> to vector<8x384xbf16>
    %18 = vector.extract_strided_slice %8 {offsets = [0, 512], sizes = [8, 512], strides = [1, 1]} : vector<8x1024xbf16> to vector<8x512xbf16>
    %c0_12 = arith.constant 0 : index
    %c0_13 = arith.constant 0 : index
    %19 = vector.load %arg6[%c0_12, %c0_13] : memref<512x384xbf16, #tpu.memory_space<vmem>>, vector<512x384xbf16>
    %cst_14 = arith.constant dense<0.000000e+00> : vector<8x384xf32>
    %20 = tpu.matmul %18, %19, %cst_14 {dimension_numbers = #tpu.dot_dimension_numbers<[1], [0], [0], [1], [0, 0, 1, 1], [], []>} : vector<8x512xbf16>, vector<512x384xbf16>, vector<8x384xf32> -> vector<8x384xf32>
    %c0_15 = arith.constant 0 : index
    %c0_16 = arith.constant 0 : index
    %21 = vector.load %arg7[%c0_15, %c0_16] : memref<1x384xf32, #tpu.memory_space<vmem>>, vector<1x384xf32>
    %22 = vector.broadcast %21 : vector<1x384xf32> to vector<8x384xf32>
    %23 = arith.addf %20, %22 : vector<8x384xf32>
    %cst_17 = arith.constant 0.000000e+00 : f32
    %24 = vector.broadcast %cst_17 : f32 to vector<8x384xf32>
    %25 = arith.maximumf %23, %24 : vector<8x384xf32>
    %26 = arith.truncf %25 : vector<8x384xf32> to vector<8x384xbf16>
    %27 = tpu.concatenate %17, %26 in 1 : vector<8x384xbf16>, vector<8x384xbf16> -> vector<8x768xbf16>
    %c0_18 = arith.constant 0 : index
    %c0_19 = arith.constant 0 : index
    %28 = vector.load %arg8[%c0_18, %c0_19] : memref<768x128xbf16, #tpu.memory_space<vmem>>, vector<768x128xbf16>
    %cst_20 = arith.constant dense<0.000000e+00> : vector<8x128xf32>
    %29 = tpu.matmul %27, %28, %cst_20 {dimension_numbers = #tpu.dot_dimension_numbers<[1], [0], [0], [1], [0, 0, 1, 1], [], []>} : vector<8x768xbf16>, vector<768x128xbf16>, vector<8x128xf32> -> vector<8x128xf32>
    %c0_21 = arith.constant 0 : index
    %c0_22 = arith.constant 0 : index
    %30 = vector.load %arg9[%c0_21, %c0_22] : memref<1x128xf32, #tpu.memory_space<vmem>>, vector<1x128xf32>
    %31 = vector.broadcast %30 : vector<1x128xf32> to vector<8x128xf32>
    %32 = arith.addf %29, %31 : vector<8x128xf32>
    %c0_23 = arith.constant 0 : index
    %c0_24 = arith.constant 0 : index
    %33 = vector.load %arg10[%c0_23, %c0_24] : memref<8x128xf32, #tpu.memory_space<vmem>>, vector<8x128xf32>
    tpu.vector_store %arg10[%c0_23, %c0_24], %32 {strides = array<i32>} : memref<8x128xf32, #tpu.memory_space<vmem>>, vector<8x128xf32>,
    return
  }
  func.func @transform_0(%arg0: i32) -> (i32, i32) {
    %c0_i32 = arith.constant 0 : i32
    %c0_i32_0 = arith.constant 0 : i32
    return %arg0, %c0_i32 : i32, i32
  }
  func.func @transform_1(%arg0: i32) -> (i32, i32) {
    %c0_i32 = arith.constant 0 : i32
    %c0_i32_0 = arith.constant 0 : i32
    %c0_i32_1 = arith.constant 0 : i32
    return %c0_i32, %c0_i32_0 : i32, i32
  }
  func.func @transform_2(%arg0: i32) -> (i32, i32) {
    %c0_i32 = arith.constant 0 : i32
    %c0_i32_0 = arith.constant 0 : i32
    %c0_i32_1 = arith.constant 0 : i32
    return %c0_i32, %c0_i32_0 : i32, i32
  }
  func.func @transform_3(%arg0: i32) -> (i32, i32) {
    %c0_i32 = arith.constant 0 : i32
    %c0_i32_0 = arith.constant 0 : i32
    %c0_i32_1 = arith.constant 0 : i32
    return %c0_i32, %c0_i32_0 : i32, i32
  }
  func.func @transform_4(%arg0: i32) -> (i32, i32) {
    %c0_i32 = arith.constant 0 : i32
    %c0_i32_0 = arith.constant 0 : i32
    %c0_i32_1 = arith.constant 0 : i32
    return %c0_i32, %c0_i32_0 : i32, i32
  }
  func.func @transform_5(%arg0: i32) -> (i32, i32) {
    %c0_i32 = arith.constant 0 : i32
    %c0_i32_0 = arith.constant 0 : i32
    %c0_i32_1 = arith.constant 0 : i32
    return %c0_i32, %c0_i32_0 : i32, i32
  }
  func.func @transform_6(%arg0: i32) -> (i32, i32) {
    %c0_i32 = arith.constant 0 : i32
    %c0_i32_0 = arith.constant 0 : i32
    %c0_i32_1 = arith.constant 0 : i32
    return %c0_i32, %c0_i32_0 : i32, i32
  }
  func.func @transform_7(%arg0: i32) -> (i32, i32) {
    %c0_i32 = arith.constant 0 : i32
    %c0_i32_0 = arith.constant 0 : i32
    %c0_i32_1 = arith.constant 0 : i32
    return %c0_i32, %c0_i32_0 : i32, i32
  }
  func.func @transform_8(%arg0: i32) -> (i32, i32) {
    %c0_i32 = arith.constant 0 : i32
    %c0_i32_0 = arith.constant 0 : i32
    %c0_i32_1 = arith.constant 0 : i32
    return %c0_i32, %c0_i32_0 : i32, i32
  }
  func.func @transform_9(%arg0: i32) -> (i32, i32) {
    %c0_i32 = arith.constant 0 : i32
    %c0_i32_0 = arith.constant 0 : i32
    return %arg0, %c0_i32 : i32, i32
  }
}

</mosaic_0001>

<llo_original>
// kernel: _critic_forward.1
$region0: #{_critic_forward.1}
  #allocation0 [shape = 'u32[]', space=smem, size = 0x4, offset = 0x4, fixed_abs, tag = 'smem constant byte address 0x4 - core index']
  #allocation1 [shape = 'u32[144,128]{1,0:T(1,128)}', space=vmem, size = 0x12000, scoped, tag = 'internal scratch']
  %s0 = inlined_call_operand.vmem [shape: bf16[8,128], index: 0, kind: input, shape index: {}]
  %s1 = inlined_call_operand.hbm [shape: bf16[128,1024], index: 1, kind: input, shape index: {}]
  %s2 = inlined_call_operand.vmem [shape: f32[1,1024], index: 2, kind: input, shape index: {}]
  %s3 = inlined_call_operand.hbm [shape: bf16[512,384], index: 3, kind: input, shape index: {}]
  %s4 = inlined_call_operand.vmem [shape: f32[1,384], index: 4, kind: input, shape index: {}]
  %s5 = inlined_call_operand.hbm [shape: bf16[512,384], index: 5, kind: input, shape index: {}]
  %s6 = inlined_call_operand.vmem [shape: f32[1,384], index: 6, kind: input, shape index: {}]
  %s7 = inlined_call_operand.hbm [shape: bf16[768,128], index: 7, kind: input, shape index: {}]
  %s8 = inlined_call_operand.vmem [shape: f32[1,128], index: 8, kind: input, shape index: {}]
  %s9 = inlined_call_operand.vmem [shape: f32[8,128], index: 9, kind: output, shape index: {}]
  %s10 = sld [smem:[#allocation0]]
  $region62: #{_critic_forward.1} parent=0
    _
  %s12 = ssub.s32 1, %s10
  %s13 = scalar_select 0, %s12, %s10
  $region1: #{_critic_forward.1} parent=0
    #allocation2 [shape = 'u8[262144]{0}', space=vmem, size = 0x40000, scoped, tag = 'input window, operand 1, single buffered']
    #allocation3 [shape = 's32[1]{0}', space=sflag, size = 0x4, scoped, tag = 'scoped memory for _critic_forward.1']
    #allocation4 [shape = 'u8[393216]{0}', space=vmem, size = 0x60000, scoped, tag = 'input window, operand 3, single buffered']
    #allocation5 [shape = 's32[1]{0}', space=sflag, size = 0x4, scoped, tag = 'scoped memory for _critic_forward.1']
    #allocation6 [shape = 'u8[393216]{0}', space=vmem, size = 0x60000, scoped, tag = 'input window, operand 5, single buffered']
    #allocation7 [shape = 'u8[196608]{0}', space=vmem, size = 0x30000, scoped, tag = 'input window, operand 7, single buffered']
    #allocation8 [shape = 's32[1]{0}', space=sflag, size = 0x4, scoped, tag = 'scoped memory for _critic_forward.1']
    %14 = vsyncpa [#allocation3], 0
    %15 = vsyncpa [#allocation5], 0
    %16 = vsyncpa [#allocation8], 0
    // Predicated region
    $region2: #{_critic_forward.1} parent=1 // pred_check
      _
    $region3: #{_critic_forward.1} parent=1 // pred_check_branch
      %18 = sbr.rel (0) target = $region5
    $region4: #{_critic_forward.1} parent=1 // pred_region
      _
    $region5: #{_critic_forward.1} parent=1 // pred_fallthru
      _
    // Predicated region
    $region6: #{_critic_forward.1} parent=1 // pred_check
      _
    $region7: #{_critic_forward.1} parent=1 // pred_check_branch
      %20 = sbr.rel (0) target = $region9
    $region8: #{_critic_forward.1} parent=1 // pred_region
      %s22 = ssub.s32 8192, 8192
      %23 = vsyncadd [#allocation3], %s22
      %s24 = sshll.u32 [#allocation2], 4
      %s25 = int_to_ptr.vmem [resolvable:$true] %s24
      %30 = dma.hbm_to_vmem [thread:$0]  %s1, 8192, %s25, [#allocation3], 512, 512, 32
    $region9: #{_critic_forward.1} parent=1 // pred_fallthru
      _
    // Predicated region
    $region10: #{_critic_forward.1} parent=1 // pred_check
      _
    $region11: #{_critic_forward.1} parent=1 // pred_check_branch
      %32 = sbr.rel (0) target = $region13
    $region12: #{_critic_forward.1} parent=1 // pred_region
      _
    $region13: #{_critic_forward.1} parent=1 // pred_fallthru
      _
    // Predicated region
    $region14: #{_critic_forward.1} parent=1 // pred_check
      _
    $region15: #{_critic_forward.1} parent=1 // pred_check_branch
      %34 = sbr.rel (0) target = $region17
    $region16: #{_critic_forward.1} parent=1 // pred_region
      %s36 = ssub.s32 12288, 12288
      %37 = vsyncadd [#allocation5], %s36
      %s38 = sshll.u32 [#allocation4], 4
      %s39 = int_to_ptr.vmem [resolvable:$true] %s38
      %44 = dma.hbm_to_vmem [thread:$0]  %s3, 12288, %s39, [#allocation5], 192, 192, 12
    $region17: #{_critic_forward.1} parent=1 // pred_fallthru
      _
    // Predicated region
    $region18: #{_critic_forward.1} parent=1 // pred_check
      _
    $region19: #{_critic_forward.1} parent=1 // pred_check_branch
      %46 = sbr.rel (0) target = $region21
    $region20: #{_critic_forward.1} parent=1 // pred_region
      _
    $region21: #{_critic_forward.1} parent=1 // pred_fallthru
      _
    // Predicated region
    $region22: #{_critic_forward.1} parent=1 // pred_check
      _
    $region23: #{_critic_forward.1} parent=1 // pred_check_branch
      %48 = sbr.rel (0) target = $region25
    $region24: #{_critic_forward.1} parent=1 // pred_region
      %s50 = ssub.s32 12288, 12288
      %51 = vsyncadd [#allocation5], %s50
      %s52 = sshll.u32 [#allocation6], 4
      %s53 = int_to_ptr.vmem [resolvable:$true] %s52
      %58 = dma.hbm_to_vmem [thread:$0]  %s5, 12288, %s53, [#allocation5], 192, 192, 12
    $region25: #{_critic_forward.1} parent=1 // pred_fallthru
      _
    // Predicated region
    $region26: #{_critic_forward.1} parent=1 // pred_check
      _
    $region27: #{_critic_forward.1} parent=1 // pred_check_branch
      %60 = sbr.rel (0) target = $region29
    $region28: #{_critic_forward.1} parent=1 // pred_region
      _
    $region29: #{_critic_forward.1} parent=1 // pred_fallthru
      _
    // Predicated region
    $region30: #{_critic_forward.1} parent=1 // pred_check
      _
    $region31: #{_critic_forward.1} parent=1 // pred_check_branch
      %62 = sbr.rel (0) target = $region33
    $region32: #{_critic_forward.1} parent=1 // pred_region
      %s64 = ssub.s32 6144, 6144
      %65 = vsyncadd [#allocation8], %s64
      %s66 = sshll.u32 [#allocation7], 4
      %s67 = int_to_ptr.vmem [resolvable:$true] %s66
      %72 = dma.hbm_to_vmem [thread:$0]  %s7, 6144, %s67, [#allocation8], 64, 64, 4
    $region33: #{_critic_forward.1} parent=1 // pred_fallthru
      _
    // Predicated region
    $region34: #{_critic_forward.1} parent=1 // pred_check
      _
    $region35: #{_critic_forward.1} parent=1 // pred_check_branch
      %74 = sbr.rel (0) target = $region37
    $region36: #{_critic_forward.1} parent=1 // pred_region
      _
    $region37: #{_critic_forward.1} parent=1 // pred_fallthru
      _
    // Predicated region
    $region38: #{_critic_forward.1} parent=1 // pred_check
      _
    $region39: #{_critic_forward.1} parent=1 // pred_check_branch
      %76 = sbr.rel (0) target = $region41
    $region40: #{_critic_forward.1} parent=1 // pred_region
      %77 = dma.done [#allocation3], 8192
    $region41: #{_critic_forward.1} parent=1 // pred_fallthru
      _
    // Predicated region
    $region42: #{_critic_forward.1} parent=1 // pred_check
      _
    $region43: #{_critic_forward.1} parent=1 // pred_check_branch
      %79 = sbr.rel (0) target = $region45
    $region44: #{_critic_forward.1} parent=1 // pred_region
      %80 = dma.done [#allocation5], 12288
    $region45: #{_critic_forward.1} parent=1 // pred_fallthru
      _
    // Predicated region
    $region46: #{_critic_forward.1} parent=1 // pred_check
      _
    $region47: #{_critic_forward.1} parent=1 // pred_check_branch
      %82 = sbr.rel (0) target = $region49
    $region48: #{_critic_forward.1} parent=1 // pred_region
      %83 = dma.done [#allocation5], 12288
    $region49: #{_critic_forward.1} parent=1 // pred_fallthru
      _
    // Predicated region
    $region50: #{_critic_forward.1} parent=1 // pred_check
      _
    $region51: #{_critic_forward.1} parent=1 // pred_check_branch
      %85 = sbr.rel (0) target = $region53
    $region52: #{_critic_forward.1} parent=1 // pred_region
      %86 = dma.done [#allocation8], 6144
    $region53: #{_critic_forward.1} parent=1 // pred_fallthru
      _
    %v88 = vld [vmem:[%s0] sm:$0xf]
    %v89 = vld [vmem:[#allocation2] sm:$0xff]
    %v90 = vld [vmem:[#allocation2 + $0x8] sm:$0xff]
    %v91 = vld [vmem:[#allocation2 + $0x10] sm:$0xff]
    %v92 = vld [vmem:[#allocation2 + $0x18] sm:$0xff]
    %v93 = vld [vmem:[#allocation2 + $0x20] sm:$0xff]
    %v94 = vld [vmem:[#allocation2 + $0x28] sm:$0xff]
    %v95 = vld [vmem:[#allocation2 + $0x30] sm:$0xff]
    %v96 = vld [vmem:[#allocation2 + $0x38] sm:$0xff]
    %v97 = vld [vmem:[#allocation2 + $0x40] sm:$0xff]
    %v98 = vld [vmem:[#allocation2 + $0x48] sm:$0xff]
    %v99 = vld [vmem:[#allocation2 + $0x50] sm:$0xff]
    %v100 = vld [vmem:[#allocation2 + $0x58] sm:$0xff]
    %v101 = vld [vmem:[#allocation2 + $0x60] sm:$0xff]
    %v102 = vld [vmem:[#allocation2 + $0x68] sm:$0xff]
    %v103 = vld [vmem:[#allocation2 + $0x70] sm:$0xff]
    %v104 = vld [vmem:[#allocation2 + $0x78] sm:$0xff]
    %v105 = vld [vmem:[#allocation2 + $0x80] sm:$0xff]
    %v106 = vld [vmem:[#allocation2 + $0x88] sm:$0xff]
    %v107 = vld [vmem:[#allocation2 + $0x90] sm:$0xff]
    %v108 = vld [vmem:[#allocation2 + $0x98] sm:$0xff]
    %v109 = vld [vmem:[#allocation2 + $0xa0] sm:$0xff]
    %v110 = vld [vmem:[#allocation2 + $0xa8] sm:$0xff]
    %v111 = vld [vmem:[#allocation2 + $0xb0] sm:$0xff]
    %v112 = vld [vmem:[#allocation2 + $0xb8] sm:$0xff]
    %v113 = vld [vmem:[#allocation2 + $0xc0] sm:$0xff]
    %v114 = vld [vmem:[#allocation2 + $0xc8] sm:$0xff]
    %v115 = vld [vmem:[#allocation2 + $0xd0] sm:$0xff]
    %v116 = vld [vmem:[#allocation2 + $0xd8] sm:$0xff]
    %v117 = vld [vmem:[#allocation2 + $0xe0] sm:$0xff]
    %v118 = vld [vmem:[#allocation2 + $0xe8] sm:$0xff]
    %v119 = vld [vmem:[#allocation2 + $0xf0] sm:$0xff]
    %v120 = vld [vmem:[#allocation2 + $0xf8] sm:$0xff]
    %v121 = vld [vmem:[#allocation2 + $0x100] sm:$0xff]
    %v122 = vld [vmem:[#allocation2 + $0x108] sm:$0xff]
    %v123 = vld [vmem:[#allocation2 + $0x110] sm:$0xff]
    %v124 = vld [vmem:[#allocation2 + $0x118] sm:$0xff]
    %v125 = vld [vmem:[#allocation2 + $0x120] sm:$0xff]
    %v126 = vld [vmem:[#allocation2 + $0x128] sm:$0xff]
    %v127 = vld [vmem:[#allocation2 + $0x130] sm:$0xff]
    %v128 = vld [vmem:[#allocation2 + $0x138] sm:$0xff]
    %v129 = vld [vmem:[#allocation2 + $0x140] sm:$0xff]
    %v130 = vld [vmem:[#allocation2 + $0x148] sm:$0xff]
    %v131 = vld [vmem:[#allocation2 + $0x150] sm:$0xff]
    %v132 = vld [vmem:[#allocation2 + $0x158] sm:$0xff]
    %v133 = vld [vmem:[#allocation2 + $0x160] sm:$0xff]
    %v134 = vld [vmem:[#allocation2 + $0x168] sm:$0xff]
    %v135 = vld [vmem:[#allocation2 + $0x170] sm:$0xff]
    %v136 = vld [vmem:[#allocation2 + $0x178] sm:$0xff]
    %v137 = vld [vmem:[#allocation2 + $0x180] sm:$0xff]
    %v138 = vld [vmem:[#allocation2 + $0x188] sm:$0xff]
    %v139 = vld [vmem:[#allocation2 + $0x190] sm:$0xff]
    %v140 = vld [vmem:[#allocation2 + $0x198] sm:$0xff]
    %v141 = vld [vmem:[#allocation2 + $0x1a0] sm:$0xff]
    %v142 = vld [vmem:[#allocation2 + $0x1a8] sm:$0xff]
    %v143 = vld [vmem:[#allocation2 + $0x1b0] sm:$0xff]
    %v144 = vld [vmem:[#allocation2 + $0x1b8] sm:$0xff]
    %v145 = vld [vmem:[#allocation2 + $0x1c0] sm:$0xff]
    %v146 = vld [vmem:[#allocation2 + $0x1c8] sm:$0xff]
    %v147 = vld [vmem:[#allocation2 + $0x1d0] sm:$0xff]
    %v148 = vld [vmem:[#allocation2 + $0x1d8] sm:$0xff]
    %v149 = vld [vmem:[#allocation2 + $0x1e0] sm:$0xff]
    %v150 = vld [vmem:[#allocation2 + $0x1e8] sm:$0xff]
    %v151 = vld [vmem:[#allocation2 + $0x1f0] sm:$0xff]
    %v152 = vld [vmem:[#allocation2 + $0x1f8] sm:$0xff]
    %v153 = vld [vmem:[%s2] sm:$0xff]
    %v155 = vlaneseq
    %v156 = vshrl.u32 %v155, 7
    %v157 = vsub.s32 0, %v156
    %v158 = vrot.slane %v153, %v157
    %v159 = vlaneseq
    %v160 = vshrl.u32 %v159, 7
    %v161 = vsub.s32 1, %v160
    %v162 = vrot.slane %v153, %v161
    %v163 = vlaneseq
    %v164 = vshrl.u32 %v163, 7
    %v165 = vsub.s32 2, %v164
    %v166 = vrot.slane %v153, %v165
    %v167 = vlaneseq
    %v168 = vshrl.u32 %v167, 7
    %v169 = vsub.s32 3, %v168
    %v170 = vrot.slane %v153, %v169
    %v171 = vlaneseq
    %v172 = vshrl.u32 %v171, 7
    %v173 = vsub.s32 4, %v172
    %v174 = vrot.slane %v153, %v173
    %v175 = vlaneseq
    %v176 = vshrl.u32 %v175, 7
    %v177 = vsub.s32 5, %v176
    %v178 = vrot.slane %v153, %v177
    %v179 = vlaneseq
    %v180 = vshrl.u32 %v179, 7
    %v181 = vsub.s32 6, %v180
    %v182 = vrot.slane %v153, %v181
    %v183 = vlaneseq
    %v184 = vshrl.u32 %v183, 7
    %v185 = vsub.s32 7, %v184
    %v186 = vrot.slane %v153, %v185
    %v259 = vunpack.c.l.b16 %v89
    %v260 = vunpack.c.h.b16 %v89
    %v261 = vunpack.c.l.b16 %v90
    %v262 = vunpack.c.h.b16 %v90
    %v263 = vunpack.c.l.b16 %v91
    %v264 = vunpack.c.h.b16 %v91
    %v265 = vunpack.c.l.b16 %v92
    %v266 = vunpack.c.h.b16 %v92
    %v267 = vunpack.c.l.b16 %v93
    %v268 = vunpack.c.h.b16 %v93
    %v269 = vunpack.c.l.b16 %v94
    %v270 = vunpack.c.h.b16 %v94
    %v271 = vunpack.c.l.b16 %v95
    %v272 = vunpack.c.h.b16 %v95
    %v273 = vunpack.c.l.b16 %v96
    %v274 = vunpack.c.h.b16 %v96
    %v275 = vunpack.c.l.b16 %v97
    %v276 = vunpack.c.h.b16 %v97
    %v277 = vunpack.c.l.b16 %v98
    %v278 = vunpack.c.h.b16 %v98
    %v279 = vunpack.c.l.b16 %v99
    %v280 = vunpack.c.h.b16 %v99
    %v281 = vunpack.c.l.b16 %v100
    %v282 = vunpack.c.h.b16 %v100
    %v283 = vunpack.c.l.b16 %v101
    %v284 = vunpack.c.h.b16 %v101
    %v285 = vunpack.c.l.b16 %v102
    %v286 = vunpack.c.h.b16 %v102
    %v287 = vunpack.c.l.b16 %v103
    %v288 = vunpack.c.h.b16 %v103
    %v289 = vunpack.c.l.b16 %v104
    %v290 = vunpack.c.h.b16 %v104
    %v291 = vunpack.c.l.b16 %v105
    %v292 = vunpack.c.h.b16 %v105
    %v293 = vunpack.c.l.b16 %v106
    %v294 = vunpack.c.h.b16 %v106
    %v295 = vunpack.c.l.b16 %v107
    %v296 = vunpack.c.h.b16 %v107
    %v297 = vunpack.c.l.b16 %v108
    %v298 = vunpack.c.h.b16 %v108
    %v299 = vunpack.c.l.b16 %v109
    %v300 = vunpack.c.h.b16 %v109
    %v301 = vunpack.c.l.b16 %v110
    %v302 = vunpack.c.h.b16 %v110
    %v303 = vunpack.c.l.b16 %v111
    %v304 = vunpack.c.h.b16 %v111
    %v305 = vunpack.c.l.b16 %v112
    %v306 = vunpack.c.h.b16 %v112
    %v307 = vunpack.c.l.b16 %v113
    %v308 = vunpack.c.h.b16 %v113
    %v309 = vunpack.c.l.b16 %v114
    %v310 = vunpack.c.h.b16 %v114
    %v311 = vunpack.c.l.b16 %v115
    %v312 = vunpack.c.h.b16 %v115
    %v313 = vunpack.c.l.b16 %v116
    %v314 = vunpack.c.h.b16 %v116
    %v315 = vunpack.c.l.b16 %v117
    %v316 = vunpack.c.h.b16 %v117
    %v317 = vunpack.c.l.b16 %v118
    %v318 = vunpack.c.h.b16 %v118
    %v319 = vunpack.c.l.b16 %v119
    %v320 = vunpack.c.h.b16 %v119
    %v321 = vunpack.c.l.b16 %v120
    %v322 = vunpack.c.h.b16 %v120
    %v323 = vunpack.c.l.b16 %v121
    %v324 = vunpack.c.h.b16 %v121
    %v325 = vunpack.c.l.b16 %v122
    %v326 = vunpack.c.h.b16 %v122
    %v327 = vunpack.c.l.b16 %v123
    %v328 = vunpack.c.h.b16 %v123
    %v329 = vunpack.c.l.b16 %v124
    %v330 = vunpack.c.h.b16 %v124
    %v331 = vunpack.c.l.b16 %v125
    %v332 = vunpack.c.h.b16 %v125
    %v333 = vunpack.c.l.b16 %v126
    %v334 = vunpack.c.h.b16 %v126
    %v335 = vunpack.c.l.b16 %v127
    %v336 = vunpack.c.h.b16 %v127
    %v337 = vunpack.c.l.b16 %v128
    %v338 = vunpack.c.h.b16 %v128
    %v339 = vunpack.c.l.b16 %v129
    %v340 = vunpack.c.h.b16 %v129
    %v341 = vunpack.c.l.b16 %v130
    %v342 = vunpack.c.h.b16 %v130
    %v343 = vunpack.c.l.b16 %v131
    %v344 = vunpack.c.h.b16 %v131
    %v345 = vunpack.c.l.b16 %v132
    %v346 = vunpack.c.h.b16 %v132
    %v347 = vunpack.c.l.b16 %v133
    %v348 = vunpack.c.h.b16 %v133
    %v349 = vunpack.c.l.b16 %v134
    %v350 = vunpack.c.h.b16 %v134
    %v351 = vunpack.c.l.b16 %v135
    %v352 = vunpack.c.h.b16 %v135
    %v353 = vunpack.c.l.b16 %v136
    %v354 = vunpack.c.h.b16 %v136
    %v355 = vunpack.c.l.b16 %v137
    %v356 = vunpack.c.h.b16 %v137
    %v357 = vunpack.c.l.b16 %v138
    %v358 = vunpack.c.h.b16 %v138
    %v359 = vunpack.c.l.b16 %v139
    %v360 = vunpack.c.h.b16 %v139
    %v361 = vunpack.c.l.b16 %v140
    %v362 = vunpack.c.h.b16 %v140
    %v363 = vunpack.c.l.b16 %v141
    %v364 = vunpack.c.h.b16 %v141
    %v365 = vunpack.c.l.b16 %v142
    %v366 = vunpack.c.h.b16 %v142
    %v367 = vunpack.c.l.b16 %v143
    %v368 = vunpack.c.h.b16 %v143
    %v369 = vunpack.c.l.b16 %v144
    %v370 = vunpack.c.h.b16 %v144
    %v371 = vunpack.c.l.b16 %v145
    %v372 = vunpack.c.h.b16 %v145
    %v373 = vunpack.c.l.b16 %v146
    %v374 = vunpack.c.h.b16 %v146
    %v375 = vunpack.c.l.b16 %v147
    %v376 = vunpack.c.h.b16 %v147
    %v377 = vunpack.c.l.b16 %v148
    %v378 = vunpack.c.h.b16 %v148
    %v379 = vunpack.c.l.b16 %v149
    %v380 = vunpack.c.h.b16 %v149
    %v381 = vunpack.c.l.b16 %v150
    %v382 = vunpack.c.h.b16 %v150
    %v383 = vunpack.c.l.b16 %v151
    %v384 = vunpack.c.h.b16 %v151
    %v385 = vunpack.c.l.b16 %v152
    %v386 = vunpack.c.h.b16 %v152
    %v387 = vpack.c.b16 %v267, %v259
    %v388 = vpack.c.b16 %v268, %v260
    %v389 = vpack.c.b16 %v269, %v261
    %v390 = vpack.c.b16 %v270, %v262
    %v391 = vpack.c.b16 %v271, %v263
    %v392 = vpack.c.b16 %v272, %v264
    %v393 = vpack.c.b16 %v273, %v265
    %v394 = vpack.c.b16 %v274, %v266
    %v395 = vpack.c.b16 %v283, %v275
    %v396 = vpack.c.b16 %v284, %v276
    %v397 = vpack.c.b16 %v285, %v277
    %v398 = vpack.c.b16 %v286, %v278
    %v399 = vpack.c.b16 %v287, %v279
    %v400 = vpack.c.b16 %v288, %v280
    %v401 = vpack.c.b16 %v289, %v281
    %v402 = vpack.c.b16 %v290, %v282
    %v403 = vpack.c.b16 %v299, %v291
    %v404 = vpack.c.b16 %v300, %v292
    %v405 = vpack.c.b16 %v301, %v293
    %v406 = vpack.c.b16 %v302, %v294
    %v407 = vpack.c.b16 %v303, %v295
    %v408 = vpack.c.b16 %v304, %v296
    %v409 = vpack.c.b16 %v305, %v297
    %v410 = vpack.c.b16 %v306, %v298
    %v411 = vpack.c.b16 %v315, %v307
    %v412 = vpack.c.b16 %v316, %v308
    %v413 = vpack.c.b16 %v317, %v309
    %v414 = vpack.c.b16 %v318, %v310
    %v415 = vpack.c.b16 %v319, %v311
    %v416 = vpack.c.b16 %v320, %v312
    %v417 = vpack.c.b16 %v321, %v313
    %v418 = vpack.c.b16 %v322, %v314
    %v419 = vpack.c.b16 %v331, %v323
    %v420 = vpack.c.b16 %v332, %v324
    %v421 = vpack.c.b16 %v333, %v325
    %v422 = vpack.c.b16 %v334, %v326
    %v423 = vpack.c.b16 %v335, %v327
    %v424 = vpack.c.b16 %v336, %v328
    %v425 = vpack.c.b16 %v337, %v329
    %v426 = vpack.c.b16 %v338, %v330
    %v427 = vpack.c.b16 %v347, %v339
    %v428 = vpack.c.b16 %v348, %v340
    %v429 = vpack.c.b16 %v349, %v341
    %v430 = vpack.c.b16 %v350, %v342
    %v431 = vpack.c.b16 %v351, %v343
    %v432 = vpack.c.b16 %v352, %v344
    %v433 = vpack.c.b16 %v353, %v345
    %v434 = vpack.c.b16 %v354, %v346
    %v435 = vpack.c.b16 %v363, %v355
    %v436 = vpack.c.b16 %v364, %v356
    %v437 = vpack.c.b16 %v365, %v357
    %v438 = vpack.c.b16 %v366, %v358
    %v439 = vpack.c.b16 %v367, %v359
    %v440 = vpack.c.b16 %v368, %v360
    %v441 = vpack.c.b16 %v369, %v361
    %v442 = vpack.c.b16 %v370, %v362
    %v443 = vpack.c.b16 %v379, %v371
    %v444 = vpack.c.b16 %v380, %v372
    %v445 = vpack.c.b16 %v381, %v373
    %v446 = vpack.c.b16 %v382, %v374
    %v447 = vpack.c.b16 %v383, %v375
    %v448 = vpack.c.b16 %v384, %v376
    %v449 = vpack.c.b16 %v385, %v377
    %v450 = vpack.c.b16 %v386, %v378
    %515 = vmatprep.subr.bf16.mxu0 %v388
    %516 = vmatpush1.bf16.msra.mxu0 %v387
    %517 = vmatprep.subr.bf16.mxu0 %v396
    %518 = vmatpush1.bf16.msra.mxu0 %v395
    %519 = vmatprep.subr.bf16.mxu0 %v404
    %520 = vmatpush1.bf16.msra.mxu0 %v403
    %521 = vmatprep.subr.bf16.mxu0 %v412
    %522 = vmatpush1.bf16.msra.mxu0 %v411
    %523 = vmatprep.subr.bf16.mxu0 %v420
    %524 = vmatpush1.bf16.msra.mxu0 %v419
    %525 = vmatprep.subr.bf16.mxu0 %v428
    %526 = vmatpush1.bf16.msra.mxu0 %v427
    %527 = vmatprep.subr.bf16.mxu0 %v436
    %528 = vmatpush1.bf16.msra.mxu0 %v435
    %529 = vmatprep.subr.bf16.mxu0 %v444
    %530 = vmatpush1.bf16.msra.mxu0 %v443
    %531 = vmatprep.subr.bf16.mxu0 0
    %532 = vmatpush1.bf16.msra.mxu0 0
    %533 = vmatprep.subr.bf16.mxu0 0
    %534 = vmatpush1.bf16.msra.mxu0 0
    %535 = vmatprep.subr.bf16.mxu0 0
    %536 = vmatpush1.bf16.msra.mxu0 0
    %537 = vmatprep.subr.bf16.mxu0 0
    %538 = vmatpush1.bf16.msra.mxu0 0
    %539 = vmatprep.subr.bf16.mxu0 0
    %540 = vmatpush1.bf16.msra.mxu0 0
    %541 = vmatprep.subr.bf16.mxu0 0
    %542 = vmatpush1.bf16.msra.mxu0 0
    %543 = vmatprep.subr.bf16.mxu0 0
    %544 = vmatpush1.bf16.msra.mxu0 0
    %545 = vmatprep.subr.bf16.mxu0 0
    %546 = vmatpush1.bf16.msra.mxu0 0
    %547 = vmatprep.mubr.bf16.mxu0 0
    %548 = vmatmul.mubr.bf16.gmra.mrb[0].mxu0 %v88
    %v549 = vpop.f32.mrb[0].mxu0
    %v550 = vadd.f32 %v158, %v549
    %v551 = vpop.f32.mrb[0].mxu0
    %v552 = vadd.f32 %v162, %v551
    %v553 = vpop.f32.mrb[0].mxu0
    %v554 = vpop.f32.mrb[0].mxu0
    %555 = vdwg.mxu0
    %556 = vmatprep.subr.bf16.mxu0 %v390
    %557 = vmatpush1.bf16.msra.mxu0 %v389
    %558 = vmatprep.subr.bf16.mxu0 %v398
    %559 = vmatpush1.bf16.msra.mxu0 %v397
    %560 = vmatprep.subr.bf16.mxu0 %v406
    %561 = vmatpush1.bf16.msra.mxu0 %v405
    %562 = vmatprep.subr.bf16.mxu0 %v414
    %563 = vmatpush1.bf16.msra.mxu0 %v413
    %564 = vmatprep.subr.bf16.mxu0 %v422
    %565 = vmatpush1.bf16.msra.mxu0 %v421
    %566 = vmatprep.subr.bf16.mxu0 %v430
    %567 = vmatpush1.bf16.msra.mxu0 %v429
    %568 = vmatprep.subr.bf16.mxu0 %v438
    %569 = vmatpush1.bf16.msra.mxu0 %v437
    %570 = vmatprep.subr.bf16.mxu0 %v446
    %571 = vmatpush1.bf16.msra.mxu0 %v445
    %572 = vmatprep.subr.bf16.mxu0 0
    %573 = vmatpush1.bf16.msra.mxu0 0
    %574 = vmatprep.subr.bf16.mxu0 0
    %575 = vmatpush1.bf16.msra.mxu0 0
    %576 = vmatprep.subr.bf16.mxu0 0
    %577 = vmatpush1.bf16.msra.mxu0 0
    %578 = vmatprep.subr.bf16.mxu0 0
    %579 = vmatpush1.bf16.msra.mxu0 0
    %580 = vmatprep.subr.bf16.mxu0 0
    %581 = vmatpush1.bf16.msra.mxu0 0
    %582 = vmatprep.subr.bf16.mxu0 0
    %583 = vmatpush1.bf16.msra.mxu0 0
    %584 = vmatprep.subr.bf16.mxu0 0
    %585 = vmatpush1.bf16.msra.mxu0 0
    %586 = vmatprep.subr.bf16.mxu0 0
    %587 = vmatpush1.bf16.msra.mxu0 0
    %588 = vmatprep.mubr.bf16.mxu0 0
    %589 = vmatmul.mubr.bf16.gmra.mrb[0].mxu0 %v88
    %v590 = vpop.f32.mrb[0].mxu0
    %v591 = vadd.f32 %v166, %v590
    %v592 = vpop.f32.mrb[0].mxu0
    %v593 = vadd.f32 %v170, %v592
    %v594 = vpop.f32.mrb[0].mxu0
    %v595 = vpop.f32.mrb[0].mxu0
    %596 = vdwg.mxu0
    %597 = vmatprep.subr.bf16.mxu0 %v392
    %598 = vmatpush1.bf16.msra.mxu0 %v391
    %599 = vmatprep.subr.bf16.mxu0 %v400
    %600 = vmatpush1.bf16.msra.mxu0 %v399
    %601 = vmatprep.subr.bf16.mxu0 %v408
    %602 = vmatpush1.bf16.msra.mxu0 %v407
    %603 = vmatprep.subr.bf16.mxu0 %v416
    %604 = vmatpush1.bf16.msra.mxu0 %v415
    %605 = vmatprep.subr.bf16.mxu0 %v424
    %606 = vmatpush1.bf16.msra.mxu0 %v423
    %607 = vmatprep.subr.bf16.mxu0 %v432
    %608 = vmatpush1.bf16.msra.mxu0 %v431
    %609 = vmatprep.subr.bf16.mxu0 %v440
    %610 = vmatpush1.bf16.msra.mxu0 %v439
    %611 = vmatprep.subr.bf16.mxu0 %v448
    %612 = vmatpush1.bf16.msra.mxu0 %v447
    %613 = vmatprep.subr.bf16.mxu0 0
    %614 = vmatpush1.bf16.msra.mxu0 0
    %615 = vmatprep.subr.bf16.mxu0 0
    %616 = vmatpush1.bf16.msra.mxu0 0
    %617 = vmatprep.subr.bf16.mxu0 0
    %618 = vmatpush1.bf16.msra.mxu0 0
    %619 = vmatprep.subr.bf16.mxu0 0
    %620 = vmatpush1.bf16.msra.mxu0 0
    %621 = vmatprep.subr.bf16.mxu0 0
    %622 = vmatpush1.bf16.msra.mxu0 0
    %623 = vmatprep.subr.bf16.mxu0 0
    %624 = vmatpush1.bf16.msra.mxu0 0
    %625 = vmatprep.subr.bf16.mxu0 0
    %626 = vmatpush1.bf16.msra.mxu0 0
    %627 = vmatprep.subr.bf16.mxu0 0
    %628 = vmatpush1.bf16.msra.mxu0 0
    %629 = vmatprep.mubr.bf16.mxu0 0
    %630 = vmatmul.mubr.bf16.gmra.mrb[0].mxu0 %v88
    %v631 = vpop.f32.mrb[0].mxu0
    %v632 = vadd.f32 %v174, %v631
    %v633 = vpop.f32.mrb[0].mxu0
    %v634 = vadd.f32 %v178, %v633
    %v635 = vpop.f32.mrb[0].mxu0
    %v636 = vpop.f32.mrb[0].mxu0
    %637 = vdwg.mxu0
    %638 = vmatprep.subr.bf16.mxu0 %v394
    %639 = vmatpush1.bf16.msra.mxu0 %v393
    %640 = vmatprep.subr.bf16.mxu0 %v402
    %641 = vmatpush1.bf16.msra.mxu0 %v401
    %642 = vmatprep.subr.bf16.mxu0 %v410
    %643 = vmatpush1.bf16.msra.mxu0 %v409
    %644 = vmatprep.subr.bf16.mxu0 %v418
    %645 = vmatpush1.bf16.msra.mxu0 %v417
    %646 = vmatprep.subr.bf16.mxu0 %v426
    %647 = vmatpush1.bf16.msra.mxu0 %v425
    %648 = vmatprep.subr.bf16.mxu0 %v434
    %649 = vmatpush1.bf16.msra.mxu0 %v433
    %650 = vmatprep.subr.bf16.mxu0 %v442
    %651 = vmatpush1.bf16.msra.mxu0 %v441
    %652 = vmatprep.subr.bf16.mxu0 %v450
    %653 = vmatpush1.bf16.msra.mxu0 %v449
    %654 = vmatprep.subr.bf16.mxu0 0
    %655 = vmatpush1.bf16.msra.mxu0 0
    %656 = vmatprep.subr.bf16.mxu0 0
    %657 = vmatpush1.bf16.msra.mxu0 0
    %658 = vmatprep.subr.bf16.mxu0 0
    %659 = vmatpush1.bf16.msra.mxu0 0
    %660 = vmatprep.subr.bf16.mxu0 0
    %661 = vmatpush1.bf16.msra.mxu0 0
    %662 = vmatprep.subr.bf16.mxu0 0
    %663 = vmatpush1.bf16.msra.mxu0 0
    %664 = vmatprep.subr.bf16.mxu0 0
    %665 = vmatpush1.bf16.msra.mxu0 0
    %666 = vmatprep.subr.bf16.mxu0 0
    %667 = vmatpush1.bf16.msra.mxu0 0
    %668 = vmatprep.subr.bf16.mxu0 0
    %669 = vmatpush1.bf16.msra.mxu0 0
    %670 = vmatprep.mubr.bf16.mxu0 0
    %671 = vmatmul.mubr.bf16.gmra.mrb[0].mxu0 %v88
    %v672 = vpop.f32.mrb[0].mxu0
    %v673 = vadd.f32 %v182, %v672
    %v674 = vpop.f32.mrb[0].mxu0
    %v675 = vadd.f32 %v186, %v674
    %v676 = vpop.f32.mrb[0].mxu0
    %v677 = vpop.f32.mrb[0].mxu0
    %678 = vdwg.mxu0
    %v679 = vmax.f32 %v550, 0.0
    %v680 = vmax.f32 %v552, 0.0
    %v681 = vmax.f32 %v591, 0.0
    %v682 = vmax.f32 %v593, 0.0
    %v683 = vmax.f32 %v632, 0.0
    %v684 = vmax.f32 %v634, 0.0
    %v685 = vmax.f32 %v673, 0.0
    %v686 = vmax.f32 %v675, 0.0
    %v687 = vpack.c.bf16 %v679, %v679
    %v688 = vpack.c.bf16 %v680, %v680
    %v689 = vpack.c.bf16 %v681, %v681
    %v690 = vpack.c.bf16 %v682, %v682
    %v691 = vpack.c.bf16 %v683, %v683
    %v692 = vpack.c.bf16 %v684, %v684
    %v693 = vpack.c.bf16 %v685, %v685
    %v694 = vpack.c.bf16 %v686, %v686
    %v695 = vld [vmem:[#allocation4] sm:$0xff]
    %v696 = vld [vmem:[#allocation4 + $0x8] sm:$0xf]
    %v697 = vld [vmem:[#allocation4 + $0xc] sm:$0xff]
    %v698 = vld [vmem:[#allocation4 + $0x14] sm:$0xf]
    %v699 = vld [vmem:[#allocation4 + $0x18] sm:$0xff]
    %v700 = vld [vmem:[#allocation4 + $0x20] sm:$0xf]
    %v701 = vld [vmem:[#allocation4 + $0x24] sm:$0xff]
    %v702 = vld [vmem:[#allocation4 + $0x2c] sm:$0xf]
    %v703 = vld [vmem:[#allocation4 + $0x30] sm:$0xff]
    %v704 = vld [vmem:[#allocation4 + $0x38] sm:$0xf]
    %v705 = vld [vmem:[#allocation4 + $0x3c] sm:$0xff]
    %v706 = vld [vmem:[#allocation4 + $0x44] sm:$0xf]
    %v707 = vld [vmem:[#allocation4 + $0x48] sm:$0xff]
    %v708 = vld [vmem:[#allocation4 + $0x50] sm:$0xf]
    %v709 = vld [vmem:[#allocation4 + $0x54] sm:$0xff]
    %v710 = vld [vmem:[#allocation4 + $0x5c] sm:$0xf]
    %v711 = vld [vmem:[#allocation4 + $0x60] sm:$0xff]
    %v712 = vld [vmem:[#allocation4 + $0x68] sm:$0xf]
    %v713 = vld [vmem:[#allocation4 + $0x6c] sm:$0xff]
    %v714 = vld [vmem:[#allocation4 + $0x74] sm:$0xf]
    %v715 = vld [vmem:[#allocation4 + $0x78] sm:$0xff]
    %v716 = vld [vmem:[#allocation4 + $0x80] sm:$0xf]
    %v717 = vld [vmem:[#allocation4 + $0x84] sm:$0xff]
    %v718 = vld [vmem:[#allocation4 + $0x8c] sm:$0xf]
    %v719 = vld [vmem:[#allocation4 + $0x90] sm:$0xff]
    %v720 = vld [vmem:[#allocation4 + $0x98] sm:$0xf]
    %v721 = vld [vmem:[#allocation4 + $0x9c] sm:$0xff]
    %v722 = vld [vmem:[#allocation4 + $0xa4] sm:$0xf]
    %v723 = vld [vmem:[#allocation4 + $0xa8] sm:$0xff]
    %v724 = vld [vmem:[#allocation4 + $0xb0] sm:$0xf]
    %v725 = vld [vmem:[#allocation4 + $0xb4] sm:$0xff]
    %v726 = vld [vmem:[#allocation4 + $0xbc] sm:$0xf]
    %v727 = vld [vmem:[#allocation4 + $0xc0] sm:$0xff]
    %v728 = vld [vmem:[#allocation4 + $0xc8] sm:$0xf]
    %v729 = vld [vmem:[#allocation4 + $0xcc] sm:$0xff]
    %v730 = vld [vmem:[#allocation4 + $0xd4] sm:$0xf]
    %v731 = vld [vmem:[#allocation4 + $0xd8] sm:$0xff]
    %v732 = vld [vmem:[#allocation4 + $0xe0] sm:$0xf]
    %v733 = vld [vmem:[#allocation4 + $0xe4] sm:$0xff]
    %v734 = vld [vmem:[#allocation4 + $0xec] sm:$0xf]
    %v735 = vld [vmem:[#allocation4 + $0xf0] sm:$0xff]
    %v736 = vld [vmem:[#allocation4 + $0xf8] sm:$0xf]
    %v737 = vld [vmem:[#allocation4 + $0xfc] sm:$0xff]
    %v738 = vld [vmem:[#allocation4 + $0x104] sm:$0xf]
    %v739 = vld [vmem:[#allocation4 + $0x108] sm:$0xff]
    %v740 = vld [vmem:[#allocation4 + $0x110] sm:$0xf]
    %v741 = vld [vmem:[#allocation4 + $0x114] sm:$0xff]
    %v742 = vld [vmem:[#allocation4 + $0x11c] sm:$0xf]
    %v743 = vld [vmem:[#allocation4 + $0x120] sm:$0xff]
    %v744 = vld [vmem:[#allocation4 + $0x128] sm:$0xf]
    %v745 = vld [vmem:[#allocation4 + $0x12c] sm:$0xff]
    %v746 = vld [vmem:[#allocation4 + $0x134] sm:$0xf]
    %v747 = vld [vmem:[#allocation4 + $0x138] sm:$0xff]
    %v748 = vld [vmem:[#allocation4 + $0x140] sm:$0xf]
    %v749 = vld [vmem:[#allocation4 + $0x144] sm:$0xff]
    %v750 = vld [vmem:[#allocation4 + $0x14c] sm:$0xf]
    %v751 = vld [vmem:[#allocation4 + $0x150] sm:$0xff]
    %v752 = vld [vmem:[#allocation4 + $0x158] sm:$0xf]
    %v753 = vld [vmem:[#allocation4 + $0x15c] sm:$0xff]
    %v754 = vld [vmem:[#allocation4 + $0x164] sm:$0xf]
    %v755 = vld [vmem:[#allocation4 + $0x168] sm:$0xff]
    %v756 = vld [vmem:[#allocation4 + $0x170] sm:$0xf]
    %v757 = vld [vmem:[#allocation4 + $0x174] sm:$0xff]
    %v758 = vld [vmem:[#allocation4 + $0x17c] sm:$0xf]
    %v759 = vld [vmem:[#allocation4 + $0x180] sm:$0xff]
    %v760 = vld [vmem:[#allocation4 + $0x188] sm:$0xf]
    %v761 = vld [vmem:[#allocation4 + $0x18c] sm:$0xff]
    %v762 = vld [vmem:[#allocation4 + $0x194] sm:$0xf]
    %v763 = vld [vmem:[#allocation4 + $0x198] sm:$0xff]
    %v764 = vld [vmem:[#allocation4 + $0x1a0] sm:$0xf]
    %v765 = vld [vmem:[#allocation4 + $0x1a4] sm:$0xff]
    %v766 = vld [vmem:[#allocation4 + $0x1ac] sm:$0xf]
    %v767 = vld [vmem:[#allocation4 + $0x1b0] sm:$0xff]
    %v768 = vld [vmem:[#allocation4 + $0x1b8] sm:$0xf]
    %v769 = vld [vmem:[#allocation4 + $0x1bc] sm:$0xff]
    %v770 = vld [vmem:[#allocation4 + $0x1c4] sm:$0xf]
    %v771 = vld [vmem:[#allocation4 + $0x1c8] sm:$0xff]
    %v772 = vld [vmem:[#allocation4 + $0x1d0] sm:$0xf]
    %v773 = vld [vmem:[#allocation4 + $0x1d4] sm:$0xff]
    %v774 = vld [vmem:[#allocation4 + $0x1dc] sm:$0xf]
    %v775 = vld [vmem:[#allocation4 + $0x1e0] sm:$0xff]
    %v776 = vld [vmem:[#allocation4 + $0x1e8] sm:$0xf]
    %v777 = vld [vmem:[#allocation4 + $0x1ec] sm:$0xff]
    %v778 = vld [vmem:[#allocation4 + $0x1f4] sm:$0xf]
    %v779 = vld [vmem:[#allocation4 + $0x1f8] sm:$0xff]
    %v780 = vld [vmem:[#allocation4 + $0x200] sm:$0xf]
    %v781 = vld [vmem:[#allocation4 + $0x204] sm:$0xff]
    %v782 = vld [vmem:[#allocation4 + $0x20c] sm:$0xf]
    %v783 = vld [vmem:[#allocation4 + $0x210] sm:$0xff]
    %v784 = vld [vmem:[#allocation4 + $0x218] sm:$0xf]
    %v785 = vld [vmem:[#allocation4 + $0x21c] sm:$0xff]
    %v786 = vld [vmem:[#allocation4 + $0x224] sm:$0xf]
    %v787 = vld [vmem:[#allocation4 + $0x228] sm:$0xff]
    %v788 = vld [vmem:[#allocation4 + $0x230] sm:$0xf]
    %v789 = vld [vmem:[#allocation4 + $0x234] sm:$0xff]
    %v790 = vld [vmem:[#allocation4 + $0x23c] sm:$0xf]
    %v791 = vld [vmem:[#allocation4 + $0x240] sm:$0xff]
    %v792 = vld [vmem:[#allocation4 + $0x248] sm:$0xf]
    %v793 = vld [vmem:[#allocation4 + $0x24c] sm:$0xff]
    %v794 = vld [vmem:[#allocation4 + $0x254] sm:$0xf]
    %v795 = vld [vmem:[#allocation4 + $0x258] sm:$0xff]
    %v796 = vld [vmem:[#allocation4 + $0x260] sm:$0xf]
    %v797 = vld [vmem:[#allocation4 + $0x264] sm:$0xff]
    %v798 = vld [vmem:[#allocation4 + $0x26c] sm:$0xf]
    %v799 = vld [vmem:[#allocation4 + $0x270] sm:$0xff]
    %v800 = vld [vmem:[#allocation4 + $0x278] sm:$0xf]
    %v801 = vld [vmem:[#allocation4 + $0x27c] sm:$0xff]
    %v802 = vld [vmem:[#allocation4 + $0x284] sm:$0xf]
    %v803 = vld [vmem:[#allocation4 + $0x288] sm:$0xff]
    %v804 = vld [vmem:[#allocation4 + $0x290] sm:$0xf]
    %v805 = vld [vmem:[#allocation4 + $0x294] sm:$0xff]
    %v806 = vld [vmem:[#allocation4 + $0x29c] sm:$0xf]
    %v807 = vld [vmem:[#allocation4 + $0x2a0] sm:$0xff]
    %v808 = vld [vmem:[#allocation4 + $0x2a8] sm:$0xf]
    %v809 = vld [vmem:[#allocation4 + $0x2ac] sm:$0xff]
    %v810 = vld [vmem:[#allocation4 + $0x2b4] sm:$0xf]
    %v811 = vld [vmem:[#allocation4 + $0x2b8] sm:$0xff]
    %v812 = vld [vmem:[#allocation4 + $0x2c0] sm:$0xf]
    %v813 = vld [vmem:[#allocation4 + $0x2c4] sm:$0xff]
    %v814 = vld [vmem:[#allocation4 + $0x2cc] sm:$0xf]
    %v815 = vld [vmem:[#allocation4 + $0x2d0] sm:$0xff]
    %v816 = vld [vmem:[#allocation4 + $0x2d8] sm:$0xf]
    %v817 = vld [vmem:[#allocation4 + $0x2dc] sm:$0xff]
    %v818 = vld [vmem:[#allocation4 + $0x2e4] sm:$0xf]
    %v819 = vld [vmem:[#allocation4 + $0x2e8] sm:$0xff]
    %v820 = vld [vmem:[#allocation4 + $0x2f0] sm:$0xf]
    %v821 = vld [vmem:[#allocation4 + $0x2f4] sm:$0xff]
    %v822 = vld [vmem:[#allocation4 + $0x2fc] sm:$0xf]
    %v823 = vld [vmem:[%s4] sm:$0x7]
    %v825 = vlaneseq
    %v826 = vshrl.u32 %v825, 7
    %v827 = vsub.s32 0, %v826
    %v828 = vrot.slane %v823, %v827
    %v829 = vlaneseq
    %v830 = vshrl.u32 %v829, 7
    %v831 = vsub.s32 1, %v830
    %v832 = vrot.slane %v823, %v831
    %v833 = vlaneseq
    %v834 = vshrl.u32 %v833, 7
    %v835 = vsub.s32 2, %v834
    %v836 = vrot.slane %v823, %v835
    %v968 = vunpack.c.l.b16 %v695
    %v969 = vunpack.c.h.b16 %v695
    %v970 = vunpack.c.l.b16 %v696
    %v971 = vunpack.c.l.b16 %v697
    %v972 = vunpack.c.h.b16 %v697
    %v973 = vunpack.c.l.b16 %v698
    %v974 = vunpack.c.l.b16 %v699
    %v975 = vunpack.c.h.b16 %v699
    %v976 = vunpack.c.l.b16 %v700
    %v977 = vunpack.c.l.b16 %v701
    %v978 = vunpack.c.h.b16 %v701
    %v979 = vunpack.c.l.b16 %v702
    %v980 = vunpack.c.l.b16 %v703
    %v981 = vunpack.c.h.b16 %v703
    %v982 = vunpack.c.l.b16 %v704
    %v983 = vunpack.c.l.b16 %v705
    %v984 = vunpack.c.h.b16 %v705
    %v985 = vunpack.c.l.b16 %v706
    %v986 = vunpack.c.l.b16 %v707
    %v987 = vunpack.c.h.b16 %v707
    %v988 = vunpack.c.l.b16 %v708
    %v989 = vunpack.c.l.b16 %v709
    %v990 = vunpack.c.h.b16 %v709
    %v991 = vunpack.c.l.b16 %v710
    %v992 = vunpack.c.l.b16 %v711
    %v993 = vunpack.c.h.b16 %v711
    %v994 = vunpack.c.l.b16 %v712
    %v995 = vunpack.c.l.b16 %v713
    %v996 = vunpack.c.h.b16 %v713
    %v997 = vunpack.c.l.b16 %v714
    %v998 = vunpack.c.l.b16 %v715
    %v999 = vunpack.c.h.b16 %v715
    %v1000 = vunpack.c.l.b16 %v716
    %v1001 = vunpack.c.l.b16 %v717
    %v1002 = vunpack.c.h.b16 %v717
    %v1003 = vunpack.c.l.b16 %v718
    %v1004 = vunpack.c.l.b16 %v719
    %v1005 = vunpack.c.h.b16 %v719
    %v1006 = vunpack.c.l.b16 %v720
    %v1007 = vunpack.c.l.b16 %v721
    %v1008 = vunpack.c.h.b16 %v721
    %v1009 = vunpack.c.l.b16 %v722
    %v1010 = vunpack.c.l.b16 %v723
    %v1011 = vunpack.c.h.b16 %v723
    %v1012 = vunpack.c.l.b16 %v724
    %v1013 = vunpack.c.l.b16 %v725
    %v1014 = vunpack.c.h.b16 %v725
    %v1015 = vunpack.c.l.b16 %v726
    %v1016 = vunpack.c.l.b16 %v727
    %v1017 = vunpack.c.h.b16 %v727
    %v1018 = vunpack.c.l.b16 %v728
    %v1019 = vunpack.c.l.b16 %v729
    %v1020 = vunpack.c.h.b16 %v729
    %v1021 = vunpack.c.l.b16 %v730
    %v1022 = vunpack.c.l.b16 %v731
    %v1023 = vunpack.c.h.b16 %v731
    %v1024 = vunpack.c.l.b16 %v732
    %v1025 = vunpack.c.l.b16 %v733
    %v1026 = vunpack.c.h.b16 %v733
    %v1027 = vunpack.c.l.b16 %v734
    %v1028 = vunpack.c.l.b16 %v735
    %v1029 = vunpack.c.h.b16 %v735
    %v1030 = vunpack.c.l.b16 %v736
    %v1031 = vunpack.c.l.b16 %v737
    %v1032 = vunpack.c.h.b16 %v737
    %v1033 = vunpack.c.l.b16 %v738
    %v1034 = vunpack.c.l.b16 %v739
    %v1035 = vunpack.c.h.b16 %v739
    %v1036 = vunpack.c.l.b16 %v740
    %v1037 = vunpack.c.l.b16 %v741
    %v1038 = vunpack.c.h.b16 %v741
    %v1039 = vunpack.c.l.b16 %v742
    %v1040 = vunpack.c.l.b16 %v743
    %v1041 = vunpack.c.h.b16 %v743
    %v1042 = vunpack.c.l.b16 %v744
    %v1043 = vunpack.c.l.b16 %v745
    %v1044 = vunpack.c.h.b16 %v745
    %v1045 = vunpack.c.l.b16 %v746
    %v1046 = vunpack.c.l.b16 %v747
    %v1047 = vunpack.c.h.b16 %v747
    %v1048 = vunpack.c.l.b16 %v748
    %v1049 = vunpack.c.l.b16 %v749
    %v1050 = vunpack.c.h.b16 %v749
    %v1051 = vunpack.c.l.b16 %v750
    %v1052 = vunpack.c.l.b16 %v751
    %v1053 = vunpack.c.h.b16 %v751
    %v1054 = vunpack.c.l.b16 %v752
    %v1055 = vunpack.c.l.b16 %v753
    %v1056 = vunpack.c.h.b16 %v753
    %v1057 = vunpack.c.l.b16 %v754
    %v1058 = vunpack.c.l.b16 %v755
    %v1059 = vunpack.c.h.b16 %v755
    %v1060 = vunpack.c.l.b16 %v756
    %v1061 = vunpack.c.l.b16 %v757
    %v1062 = vunpack.c.h.b16 %v757
    %v1063 = vunpack.c.l.b16 %v758
    %v1064 = vunpack.c.l.b16 %v759
    %v1065 = vunpack.c.h.b16 %v759
    %v1066 = vunpack.c.l.b16 %v760
    %v1067 = vunpack.c.l.b16 %v761
    %v1068 = vunpack.c.h.b16 %v761
    %v1069 = vunpack.c.l.b16 %v762
    %v1070 = vunpack.c.l.b16 %v763
    %v1071 = vunpack.c.h.b16 %v763
    %v1072 = vunpack.c.l.b16 %v764
    %v1073 = vunpack.c.l.b16 %v765
    %v1074 = vunpack.c.h.b16 %v765
    %v1075 = vunpack.c.l.b16 %v766
    %v1076 = vunpack.c.l.b16 %v767
    %v1077 = vunpack.c.h.b16 %v767
    %v1078 = vunpack.c.l.b16 %v768
    %v1079 = vunpack.c.l.b16 %v769
    %v1080 = vunpack.c.h.b16 %v769
    %v1081 = vunpack.c.l.b16 %v770
    %v1082 = vunpack.c.l.b16 %v771
    %v1083 = vunpack.c.h.b16 %v771
    %v1084 = vunpack.c.l.b16 %v772
    %v1085 = vunpack.c.l.b16 %v773
    %v1086 = vunpack.c.h.b16 %v773
    %v1087 = vunpack.c.l.b16 %v774
    %v1088 = vunpack.c.l.b16 %v775
    %v1089 = vunpack.c.h.b16 %v775
    %v1090 = vunpack.c.l.b16 %v776
    %v1091 = vunpack.c.l.b16 %v777
    %v1092 = vunpack.c.h.b16 %v777
    %v1093 = vunpack.c.l.b16 %v778
    %v1094 = vunpack.c.l.b16 %v779
    %v1095 = vunpack.c.h.b16 %v779
    %v1096 = vunpack.c.l.b16 %v780
    %v1097 = vunpack.c.l.b16 %v781
    %v1098 = vunpack.c.h.b16 %v781
    %v1099 = vunpack.c.l.b16 %v782
    %v1100 = vunpack.c.l.b16 %v783
    %v1101 = vunpack.c.h.b16 %v783
    %v1102 = vunpack.c.l.b16 %v784
    %v1103 = vunpack.c.l.b16 %v785
    %v1104 = vunpack.c.h.b16 %v785
    %v1105 = vunpack.c.l.b16 %v786
    %v1106 = vunpack.c.l.b16 %v787
    %v1107 = vunpack.c.h.b16 %v787
    %v1108 = vunpack.c.l.b16 %v788
    %v1109 = vunpack.c.l.b16 %v789
    %v1110 = vunpack.c.h.b16 %v789
    %v1111 = vunpack.c.l.b16 %v790
    %v1112 = vunpack.c.l.b16 %v791
    %v1113 = vunpack.c.h.b16 %v791
    %v1114 = vunpack.c.l.b16 %v792
    %v1115 = vunpack.c.l.b16 %v793
    %v1116 = vunpack.c.h.b16 %v793
    %v1117 = vunpack.c.l.b16 %v794
    %v1118 = vunpack.c.l.b16 %v795
    %v1119 = vunpack.c.h.b16 %v795
    %v1120 = vunpack.c.l.b16 %v796
    %v1121 = vunpack.c.l.b16 %v797
    %v1122 = vunpack.c.h.b16 %v797
    %v1123 = vunpack.c.l.b16 %v798
    %v1124 = vunpack.c.l.b16 %v799
    %v1125 = vunpack.c.h.b16 %v799
    %v1126 = vunpack.c.l.b16 %v800
    %v1127 = vunpack.c.l.b16 %v801
    %v1128 = vunpack.c.h.b16 %v801
    %v1129 = vunpack.c.l.b16 %v802
    %v1130 = vunpack.c.l.b16 %v803
    %v1131 = vunpack.c.h.b16 %v803
    %v1132 = vunpack.c.l.b16 %v804
    %v1133 = vunpack.c.l.b16 %v805
    %v1134 = vunpack.c.h.b16 %v805
    %v1135 = vunpack.c.l.b16 %v806
    %v1136 = vunpack.c.l.b16 %v807
    %v1137 = vunpack.c.h.b16 %v807
    %v1138 = vunpack.c.l.b16 %v808
    %v1139 = vunpack.c.l.b16 %v809
    %v1140 = vunpack.c.h.b16 %v809
    %v1141 = vunpack.c.l.b16 %v810
    %v1142 = vunpack.c.l.b16 %v811
    %v1143 = vunpack.c.h.b16 %v811
    %v1144 = vunpack.c.l.b16 %v812
    %v1145 = vunpack.c.l.b16 %v813
    %v1146 = vunpack.c.h.b16 %v813
    %v1147 = vunpack.c.l.b16 %v814
    %v1148 = vunpack.c.l.b16 %v815
    %v1149 = vunpack.c.h.b16 %v815
    %v1150 = vunpack.c.l.b16 %v816
    %v1151 = vunpack.c.l.b16 %v817
    %v1152 = vunpack.c.h.b16 %v817
    %v1153 = vunpack.c.l.b16 %v818
    %v1154 = vunpack.c.l.b16 %v819
    %v1155 = vunpack.c.h.b16 %v819
    %v1156 = vunpack.c.l.b16 %v820
    %v1157 = vunpack.c.l.b16 %v821
    %v1158 = vunpack.c.h.b16 %v821
    %v1159 = vunpack.c.l.b16 %v822
    %v1160 = vpack.c.b16 %v971, %v968
    %v1161 = vpack.c.b16 %v972, %v969
    %v1162 = vpack.c.b16 %v973, %v970
    %v1163 = vpack.c.b16 %v977, %v974
    %v1164 = vpack.c.b16 %v978, %v975
    %v1165 = vpack.c.b16 %v979, %v976
    %v1166 = vpack.c.b16 %v983, %v980
    %v1167 = vpack.c.b16 %v984, %v981
    %v1168 = vpack.c.b16 %v985, %v982
    %v1169 = vpack.c.b16 %v989, %v986
    %v1170 = vpack.c.b16 %v990, %v987
    %v1171 = vpack.c.b16 %v991, %v988
    %v1172 = vpack.c.b16 %v995, %v992
    %v1173 = vpack.c.b16 %v996, %v993
    %v1174 = vpack.c.b16 %v997, %v994
    %v1175 = vpack.c.b16 %v1001, %v998
    %v1176 = vpack.c.b16 %v1002, %v999
    %v1177 = vpack.c.b16 %v1003, %v1000
    %v1178 = vpack.c.b16 %v1007, %v1004
    %v1179 = vpack.c.b16 %v1008, %v1005
    %v1180 = vpack.c.b16 %v1009, %v1006
    %v1181 = vpack.c.b16 %v1013, %v1010
    %v1182 = vpack.c.b16 %v1014, %v1011
    %v1183 = vpack.c.b16 %v1015, %v1012
    %v1184 = vpack.c.b16 %v1019, %v1016
    %v1185 = vpack.c.b16 %v1020, %v1017
    %v1186 = vpack.c.b16 %v1021, %v1018
    %v1187 = vpack.c.b16 %v1025, %v1022
    %v1188 = vpack.c.b16 %v1026, %v1023
    %v1189 = vpack.c.b16 %v1027, %v1024
    %v1190 = vpack.c.b16 %v1031, %v1028
    %v1191 = vpack.c.b16 %v1032, %v1029
    %v1192 = vpack.c.b16 %v1033, %v1030
    %v1193 = vpack.c.b16 %v1037, %v1034
    %v1194 = vpack.c.b16 %v1038, %v1035
    %v1195 = vpack.c.b16 %v1039, %v1036
    %v1196 = vpack.c.b16 %v1043, %v1040
    %v1197 = vpack.c.b16 %v1044, %v1041
    %v1198 = vpack.c.b16 %v1045, %v1042
    %v1199 = vpack.c.b16 %v1049, %v1046
    %v1200 = vpack.c.b16 %v1050, %v1047
    %v1201 = vpack.c.b16 %v1051, %v1048
    %v1202 = vpack.c.b16 %v1055, %v1052
    %v1203 = vpack.c.b16 %v1056, %v1053
    %v1204 = vpack.c.b16 %v1057, %v1054
    %v1205 = vpack.c.b16 %v1061, %v1058
    %v1206 = vpack.c.b16 %v1062, %v1059
    %v1207 = vpack.c.b16 %v1063, %v1060
    %v1208 = vpack.c.b16 %v1067, %v1064
    %v1209 = vpack.c.b16 %v1068, %v1065
    %v1210 = vpack.c.b16 %v1069, %v1066
    %v1211 = vpack.c.b16 %v1073, %v1070
    %v1212 = vpack.c.b16 %v1074, %v1071
    %v1213 = vpack.c.b16 %v1075, %v1072
    %v1214 = vpack.c.b16 %v1079, %v1076
    %v1215 = vpack.c.b16 %v1080, %v1077
    %v1216 = vpack.c.b16 %v1081, %v1078
    %v1217 = vpack.c.b16 %v1085, %v1082
    %v1218 = vpack.c.b16 %v1086, %v1083
    %v1219 = vpack.c.b16 %v1087, %v1084
    %v1220 = vpack.c.b16 %v1091, %v1088
    %v1221 = vpack.c.b16 %v1092, %v1089
    %v1222 = vpack.c.b16 %v1093, %v1090
    %v1223 = vpack.c.b16 %v1097, %v1094
    %v1224 = vpack.c.b16 %v1098, %v1095
    %v1225 = vpack.c.b16 %v1099, %v1096
    %v1226 = vpack.c.b16 %v1103, %v1100
    %v1227 = vpack.c.b16 %v1104, %v1101
    %v1228 = vpack.c.b16 %v1105, %v1102
    %v1229 = vpack.c.b16 %v1109, %v1106
    %v1230 = vpack.c.b16 %v1110, %v1107
    %v1231 = vpack.c.b16 %v1111, %v1108
    %v1232 = vpack.c.b16 %v1115, %v1112
    %v1233 = vpack.c.b16 %v1116, %v1113
    %v1234 = vpack.c.b16 %v1117, %v1114
    %v1235 = vpack.c.b16 %v1121, %v1118
    %v1236 = vpack.c.b16 %v1122, %v1119
    %v1237 = vpack.c.b16 %v1123, %v1120
    %v1238 = vpack.c.b16 %v1127, %v1124
    %v1239 = vpack.c.b16 %v1128, %v1125
    %v1240 = vpack.c.b16 %v1129, %v1126
    %v1241 = vpack.c.b16 %v1133, %v1130
    %v1242 = vpack.c.b16 %v1134, %v1131
    %v1243 = vpack.c.b16 %v1135, %v1132
    %v1244 = vpack.c.b16 %v1139, %v1136
    %v1245 = vpack.c.b16 %v1140, %v1137
    %v1246 = vpack.c.b16 %v1141, %v1138
    %v1247 = vpack.c.b16 %v1145, %v1142
    %v1248 = vpack.c.b16 %v1146, %v1143
    %v1249 = vpack.c.b16 %v1147, %v1144
    %v1250 = vpack.c.b16 %v1151, %v1148
    %v1251 = vpack.c.b16 %v1152, %v1149
    %v1252 = vpack.c.b16 %v1153, %v1150
    %v1253 = vpack.c.b16 %v1157, %v1154
    %v1254 = vpack.c.b16 %v1158, %v1155
    %v1255 = vpack.c.b16 %v1159, %v1156
    %1352 = vmatprep.subr.bf16.mxu0 %v1161
    %1353 = vmatpush1.bf16.msra.mxu0 %v1160
    %1354 = vmatprep.subr.bf16.mxu0 %v1164
    %1355 = vmatpush1.bf16.msra.mxu0 %v1163
    %1356 = vmatprep.subr.bf16.mxu0 %v1167
    %1357 = vmatpush1.bf16.msra.mxu0 %v1166
    %1358 = vmatprep.subr.bf16.mxu0 %v1170
    %1359 = vmatpush1.bf16.msra.mxu0 %v1169
    %1360 = vmatprep.subr.bf16.mxu0 %v1173
    %1361 = vmatpush1.bf16.msra.mxu0 %v1172
    %1362 = vmatprep.subr.bf16.mxu0 %v1176
    %1363 = vmatpush1.bf16.msra.mxu0 %v1175
    %1364 = vmatprep.subr.bf16.mxu0 %v1179
    %1365 = vmatpush1.bf16.msra.mxu0 %v1178
    %1366 = vmatprep.subr.bf16.mxu0 %v1182
    %1367 = vmatpush1.bf16.msra.mxu0 %v1181
    %1368 = vmatprep.subr.bf16.mxu0 %v1185
    %1369 = vmatpush1.bf16.msra.mxu0 %v1184
    %1370 = vmatprep.subr.bf16.mxu0 %v1188
    %1371 = vmatpush1.bf16.msra.mxu0 %v1187
    %1372 = vmatprep.subr.bf16.mxu0 %v1191
    %1373 = vmatpush1.bf16.msra.mxu0 %v1190
    %1374 = vmatprep.subr.bf16.mxu0 %v1194
    %1375 = vmatpush1.bf16.msra.mxu0 %v1193
    %1376 = vmatprep.subr.bf16.mxu0 %v1197
    %1377 = vmatpush1.bf16.msra.mxu0 %v1196
    %1378 = vmatprep.subr.bf16.mxu0 %v1200
    %1379 = vmatpush1.bf16.msra.mxu0 %v1199
    %1380 = vmatprep.subr.bf16.mxu0 %v1203
    %1381 = vmatpush1.bf16.msra.mxu0 %v1202
    %1382 = vmatprep.subr.bf16.mxu0 %v1206
    %1383 = vmatpush1.bf16.msra.mxu0 %v1205
    %1384 = vmatprep.mubr.bf16.mxu0 %v688
    %1385 = vmatmul.mubr.bf16.gmra.mrb[0].mxu0 %v687
    %v1386 = vpop.f32.mrb[0].mxu0
    %v1387 = vadd.f32 %v828, %v1386
    %v1388 = vpop.f32.mrb[0].mxu0
    %v1389 = vadd.f32 %v832, %v1388
    %v1390 = vpop.f32.mrb[0].mxu0
    %v1391 = vpop.f32.mrb[0].mxu0
    %1392 = vdwg.mxu0
    %1393 = vmatprep.subr.bf16.mxu0 %v1209
    %1394 = vmatpush1.bf16.msra.mxu0 %v1208
    %1395 = vmatprep.subr.bf16.mxu0 %v1212
    %1396 = vmatpush1.bf16.msra.mxu0 %v1211
    %1397 = vmatprep.subr.bf16.mxu0 %v1215
    %1398 = vmatpush1.bf16.msra.mxu0 %v1214
    %1399 = vmatprep.subr.bf16.mxu0 %v1218
    %1400 = vmatpush1.bf16.msra.mxu0 %v1217
    %1401 = vmatprep.subr.bf16.mxu0 %v1221
    %1402 = vmatpush1.bf16.msra.mxu0 %v1220
    %1403 = vmatprep.subr.bf16.mxu0 %v1224
    %1404 = vmatpush1.bf16.msra.mxu0 %v1223
    %1405 = vmatprep.subr.bf16.mxu0 %v1227
    %1406 = vmatpush1.bf16.msra.mxu0 %v1226
    %1407 = vmatprep.subr.bf16.mxu0 %v1230
    %1408 = vmatpush1.bf16.msra.mxu0 %v1229
    %1409 = vmatprep.subr.bf16.mxu0 %v1233
    %1410 = vmatpush1.bf16.msra.mxu0 %v1232
    %1411 = vmatprep.subr.bf16.mxu0 %v1236
    %1412 = vmatpush1.bf16.msra.mxu0 %v1235
    %1413 = vmatprep.subr.bf16.mxu0 %v1239
    %1414 = vmatpush1.bf16.msra.mxu0 %v1238
    %1415 = vmatprep.subr.bf16.mxu0 %v1242
    %1416 = vmatpush1.bf16.msra.mxu0 %v1241
    %1417 = vmatprep.subr.bf16.mxu0 %v1245
    %1418 = vmatpush1.bf16.msra.mxu0 %v1244
    %1419 = vmatprep.subr.bf16.mxu0 %v1248
    %1420 = vmatpush1.bf16.msra.mxu0 %v1247
    %1421 = vmatprep.subr.bf16.mxu0 %v1251
    %1422 = vmatpush1.bf16.msra.mxu0 %v1250
    %1423 = vmatprep.subr.bf16.mxu0 %v1254
    %1424 = vmatpush1.bf16.msra.mxu0 %v1253
    %1425 = vmatprep.mubr.bf16.mxu0 %v690
    %1426 = vmatmul.mubr.bf16.gmra.mrb[0].mxu0 %v689
    %v1427 = vpop.f32.mrb[0].mxu0
    %v1428 = vadd.f32 %v1387, %v1427
    %v1429 = vpop.f32.mrb[0].mxu0
    %v1430 = vadd.f32 %v1389, %v1429
    %v1431 = vpop.f32.mrb[0].mxu0
    %v1432 = vpop.f32.mrb[0].mxu0
    %1433 = vdwg.mxu0
    %1434 = vmatprep.subr.bf16.mxu0 0
    %1435 = vmatpush1.bf16.msra.mxu0 %v1162
    %1436 = vmatprep.subr.bf16.mxu0 0
    %1437 = vmatpush1.bf16.msra.mxu0 %v1165
    %1438 = vmatprep.subr.bf16.mxu0 0
    %1439 = vmatpush1.bf16.msra.mxu0 %v1168
    %1440 = vmatprep.subr.bf16.mxu0 0
    %1441 = vmatpush1.bf16.msra.mxu0 %v1171
    %1442 = vmatprep.subr.bf16.mxu0 0
    %1443 = vmatpush1.bf16.msra.mxu0 %v1174
    %1444 = vmatprep.subr.bf16.mxu0 0
    %1445 = vmatpush1.bf16.msra.mxu0 %v1177
    %1446 = vmatprep.subr.bf16.mxu0 0
    %1447 = vmatpush1.bf16.msra.mxu0 %v1180
    %1448 = vmatprep.subr.bf16.mxu0 0
    %1449 = vmatpush1.bf16.msra.mxu0 %v1183
    %1450 = vmatprep.subr.bf16.mxu0 0
    %1451 = vmatpush1.bf16.msra.mxu0 %v1186
    %1452 = vmatprep.subr.bf16.mxu0 0
    %1453 = vmatpush1.bf16.msra.mxu0 %v1189
    %1454 = vmatprep.subr.bf16.mxu0 0
    %1455 = vmatpush1.bf16.msra.mxu0 %v1192
    %1456 = vmatprep.subr.bf16.mxu0 0
    %1457 = vmatpush1.bf16.msra.mxu0 %v1195
    %1458 = vmatprep.subr.bf16.mxu0 0
    %1459 = vmatpush1.bf16.msra.mxu0 %v1198
    %1460 = vmatprep.subr.bf16.mxu0 0
    %1461 = vmatpush1.bf16.msra.mxu0 %v1201
    %1462 = vmatprep.subr.bf16.mxu0 0
    %1463 = vmatpush1.bf16.msra.mxu0 %v1204
    %1464 = vmatprep.subr.bf16.mxu0 0
    %1465 = vmatpush1.bf16.msra.mxu0 %v1207
    %1466 = vmatprep.mubr.bf16.mxu0 %v688
    %1467 = vmatmul.mubr.bf16.gmra.mrb[0].mxu0 %v687
    %v1468 = vpop.f32.mrb[0].mxu0
    %v1469 = vadd.f32 %v836, %v1468
    %v1470 = vpop.f32.mrb[0].mxu0
    %v1471 = vpop.f32.mrb[0].mxu0
    %v1472 = vpop.f32.mrb[0].mxu0
    %1473 = vdwg.mxu0
    %1474 = vmatprep.subr.bf16.mxu0 0
    %1475 = vmatpush1.bf16.msra.mxu0 %v1210
    %1476 = vmatprep.subr.bf16.mxu0 0
    %1477 = vmatpush1.bf16.msra.mxu0 %v1213
    %1478 = vmatprep.subr.bf16.mxu0 0
    %1479 = vmatpush1.bf16.msra.mxu0 %v1216
    %1480 = vmatprep.subr.bf16.mxu0 0
    %1481 = vmatpush1.bf16.msra.mxu0 %v1219
    %1482 = vmatprep.subr.bf16.mxu0 0
    %1483 = vmatpush1.bf16.msra.mxu0 %v1222
    %1484 = vmatprep.subr.bf16.mxu0 0
    %1485 = vmatpush1.bf16.msra.mxu0 %v1225
    %1486 = vmatprep.subr.bf16.mxu0 0
    %1487 = vmatpush1.bf16.msra.mxu0 %v1228
    %1488 = vmatprep.subr.bf16.mxu0 0
    %1489 = vmatpush1.bf16.msra.mxu0 %v1231
    %1490 = vmatprep.subr.bf16.mxu0 0
    %1491 = vmatpush1.bf16.msra.mxu0 %v1234
    %1492 = vmatprep.subr.bf16.mxu0 0
    %1493 = vmatpush1.bf16.msra.mxu0 %v1237
    %1494 = vmatprep.subr.bf16.mxu0 0
    %1495 = vmatpush1.bf16.msra.mxu0 %v1240
    %1496 = vmatprep.subr.bf16.mxu0 0
    %1497 = vmatpush1.bf16.msra.mxu0 %v1243
    %1498 = vmatprep.subr.bf16.mxu0 0
    %1499 = vmatpush1.bf16.msra.mxu0 %v1246
    %1500 = vmatprep.subr.bf16.mxu0 0
    %1501 = vmatpush1.bf16.msra.mxu0 %v1249
    %1502 = vmatprep.subr.bf16.mxu0 0
    %1503 = vmatpush1.bf16.msra.mxu0 %v1252
    %1504 = vmatprep.subr.bf16.mxu0 0
    %1505 = vmatpush1.bf16.msra.mxu0 %v1255
    %1506 = vmatprep.mubr.bf16.mxu0 %v690
    %1507 = vmatmul.mubr.bf16.gmra.mrb[0].mxu0 %v689
    %v1508 = vpop.f32.mrb[0].mxu0
    %v1509 = vadd.f32 %v1469, %v1508
    %v1510 = vpop.f32.mrb[0].mxu0
    %v1511 = vpop.f32.mrb[0].mxu0
    %v1512 = vpop.f32.mrb[0].mxu0
    %1513 = vdwg.mxu0
    %v1514 = vmax.f32 %v1428, 0.0
    %v1515 = vmax.f32 %v1430, 0.0
    %v1516 = vmax.f32 %v1509, 0.0
    %v1517 = vpack.c.bf16 %v1514, %v1514
    %v1518 = vpack.c.bf16 %v1515, %v1515
    %v1519 = vpack.c.bf16 %v1516, %v1516
    %v1520 = vld [vmem:[#allocation6] sm:$0xff]
    %v1521 = vld [vmem:[#allocation6 + $0x8] sm:$0xf]
    %v1522 = vld [vmem:[#allocation6 + $0xc] sm:$0xff]
    %v1523 = vld [vmem:[#allocation6 + $0x14] sm:$0xf]
    %v1524 = vld [vmem:[#allocation6 + $0x18] sm:$0xff]
    %v1525 = vld [vmem:[#allocation6 + $0x20] sm:$0xf]
    %v1526 = vld [vmem:[#allocation6 + $0x24] sm:$0xff]
    %v1527 = vld [vmem:[#allocation6 + $0x2c] sm:$0xf]
    %v1528 = vld [vmem:[#allocation6 + $0x30] sm:$0xff]
    %v1529 = vld [vmem:[#allocation6 + $0x38] sm:$0xf]
    %v1530 = vld [vmem:[#allocation6 + $0x3c] sm:$0xff]
    %v1531 = vld [vmem:[#allocation6 + $0x44] sm:$0xf]
    %v1532 = vld [vmem:[#allocation6 + $0x48] sm:$0xff]
    %v1533 = vld [vmem:[#allocation6 + $0x50] sm:$0xf]
    %v1534 = vld [vmem:[#allocation6 + $0x54] sm:$0xff]
    %v1535 = vld [vmem:[#allocation6 + $0x5c] sm:$0xf]
    %v1536 = vld [vmem:[#allocation6 + $0x60] sm:$0xff]
    %v1537 = vld [vmem:[#allocation6 + $0x68] sm:$0xf]
    %v1538 = vld [vmem:[#allocation6 + $0x6c] sm:$0xff]
    %v1539 = vld [vmem:[#allocation6 + $0x74] sm:$0xf]
    %v1540 = vld [vmem:[#allocation6 + $0x78] sm:$0xff]
    %v1541 = vld [vmem:[#allocation6 + $0x80] sm:$0xf]
    %v1542 = vld [vmem:[#allocation6 + $0x84] sm:$0xff]
    %v1543 = vld [vmem:[#allocation6 + $0x8c] sm:$0xf]
    %v1544 = vld [vmem:[#allocation6 + $0x90] sm:$0xff]
    %v1545 = vld [vmem:[#allocation6 + $0x98] sm:$0xf]
    %v1546 = vld [vmem:[#allocation6 + $0x9c] sm:$0xff]
    %v1547 = vld [vmem:[#allocation6 + $0xa4] sm:$0xf]
    %v1548 = vld [vmem:[#allocation6 + $0xa8] sm:$0xff]
    %v1549 = vld [vmem:[#allocation6 + $0xb0] sm:$0xf]
    %v1550 = vld [vmem:[#allocation6 + $0xb4] sm:$0xff]
    %v1551 = vld [vmem:[#allocation6 + $0xbc] sm:$0xf]
    %v1552 = vld [vmem:[#allocation6 + $0xc0] sm:$0xff]
    %v1553 = vld [vmem:[#allocation6 + $0xc8] sm:$0xf]
    %v1554 = vld [vmem:[#allocation6 + $0xcc] sm:$0xff]
    %v1555 = vld [vmem:[#allocation6 + $0xd4] sm:$0xf]
    %v1556 = vld [vmem:[#allocation6 + $0xd8] sm:$0xff]
    %v1557 = vld [vmem:[#allocation6 + $0xe0] sm:$0xf]
    %v1558 = vld [vmem:[#allocation6 + $0xe4] sm:$0xff]
    %v1559 = vld [vmem:[#allocation6 + $0xec] sm:$0xf]
    %v1560 = vld [vmem:[#allocation6 + $0xf0] sm:$0xff]
    %v1561 = vld [vmem:[#allocation6 + $0xf8] sm:$0xf]
    %v1562 = vld [vmem:[#allocation6 + $0xfc] sm:$0xff]
    %v1563 = vld [vmem:[#allocation6 + $0x104] sm:$0xf]
    %v1564 = vld [vmem:[#allocation6 + $0x108] sm:$0xff]
    %v1565 = vld [vmem:[#allocation6 + $0x110] sm:$0xf]
    %v1566 = vld [vmem:[#allocation6 + $0x114] sm:$0xff]
    %v1567 = vld [vmem:[#allocation6 + $0x11c] sm:$0xf]
    %v1568 = vld [vmem:[#allocation6 + $0x120] sm:$0xff]
    %v1569 = vld [vmem:[#allocation6 + $0x128] sm:$0xf]
    %v1570 = vld [vmem:[#allocation6 + $0x12c] sm:$0xff]
    %v1571 = vld [vmem:[#allocation6 + $0x134] sm:$0xf]
    %v1572 = vld [vmem:[#allocation6 + $0x138] sm:$0xff]
    %v1573 = vld [vmem:[#allocation6 + $0x140] sm:$0xf]
    %v1574 = vld [vmem:[#allocation6 + $0x144] sm:$0xff]
    %v1575 = vld [vmem:[#allocation6 + $0x14c] sm:$0xf]
    %v1576 = vld [vmem:[#allocation6 + $0x150] sm:$0xff]
    %v1577 = vld [vmem:[#allocation6 + $0x158] sm:$0xf]
    %v1578 = vld [vmem:[#allocation6 + $0x15c] sm:$0xff]
    %v1579 = vld [vmem:[#allocation6 + $0x164] sm:$0xf]
    %v1580 = vld [vmem:[#allocation6 + $0x168] sm:$0xff]
    %v1581 = vld [vmem:[#allocation6 + $0x170] sm:$0xf]
    %v1582 = vld [vmem:[#allocation6 + $0x174] sm:$0xff]
    %v1583 = vld [vmem:[#allocation6 + $0x17c] sm:$0xf]
    %v1584 = vld [vmem:[#allocation6 + $0x180] sm:$0xff]
    %v1585 = vld [vmem:[#allocation6 + $0x188] sm:$0xf]
    %v1586 = vld [vmem:[#allocation6 + $0x18c] sm:$0xff]
    %v1587 = vld [vmem:[#allocation6 + $0x194] sm:$0xf]
    %v1588 = vld [vmem:[#allocation6 + $0x198] sm:$0xff]
    %v1589 = vld [vmem:[#allocation6 + $0x1a0] sm:$0xf]
    %v1590 = vld [vmem:[#allocation6 + $0x1a4] sm:$0xff]
    %v1591 = vld [vmem:[#allocation6 + $0x1ac] sm:$0xf]
    %v1592 = vld [vmem:[#allocation6 + $0x1b0] sm:$0xff]
    %v1593 = vld [vmem:[#allocation6 + $0x1b8] sm:$0xf]
    %v1594 = vld [vmem:[#allocation6 + $0x1bc] sm:$0xff]
    %v1595 = vld [vmem:[#allocation6 + $0x1c4] sm:$0xf]
    %v1596 = vld [vmem:[#allocation6 + $0x1c8] sm:$0xff]
    %v1597 = vld [vmem:[#allocation6 + $0x1d0] sm:$0xf]
    %v1598 = vld [vmem:[#allocation6 + $0x1d4] sm:$0xff]
    %v1599 = vld [vmem:[#allocation6 + $0x1dc] sm:$0xf]
    %v1600 = vld [vmem:[#allocation6 + $0x1e0] sm:$0xff]
    %v1601 = vld [vmem:[#allocation6 + $0x1e8] sm:$0xf]
    %v1602 = vld [vmem:[#allocation6 + $0x1ec] sm:$0xff]
    %v1603 = vld [vmem:[#allocation6 + $0x1f4] sm:$0xf]
    %v1604 = vld [vmem:[#allocation6 + $0x1f8] sm:$0xff]
    %v1605 = vld [vmem:[#allocation6 + $0x200] sm:$0xf]
    %v1606 = vld [vmem:[#allocation6 + $0x204] sm:$0xff]
    %v1607 = vld [vmem:[#allocation6 + $0x20c] sm:$0xf]
    %v1608 = vld [vmem:[#allocation6 + $0x210] sm:$0xff]
    %v1609 = vld [vmem:[#allocation6 + $0x218] sm:$0xf]
    %v1610 = vld [vmem:[#allocation6 + $0x21c] sm:$0xff]
    %v1611 = vld [vmem:[#allocation6 + $0x224] sm:$0xf]
    %v1612 = vld [vmem:[#allocation6 + $0x228] sm:$0xff]
    %v1613 = vld [vmem:[#allocation6 + $0x230] sm:$0xf]
    %v1614 = vld [vmem:[#allocation6 + $0x234] sm:$0xff]
    %v1615 = vld [vmem:[#allocation6 + $0x23c] sm:$0xf]
    %v1616 = vld [vmem:[#allocation6 + $0x240] sm:$0xff]
    %v1617 = vld [vmem:[#allocation6 + $0x248] sm:$0xf]
    %v1618 = vld [vmem:[#allocation6 + $0x24c] sm:$0xff]
    %v1619 = vld [vmem:[#allocation6 + $0x254] sm:$0xf]
    %v1620 = vld [vmem:[#allocation6 + $0x258] sm:$0xff]
    %v1621 = vld [vmem:[#allocation6 + $0x260] sm:$0xf]
    %v1622 = vld [vmem:[#allocation6 + $0x264] sm:$0xff]
    %v1623 = vld [vmem:[#allocation6 + $0x26c] sm:$0xf]
    %v1624 = vld [vmem:[#allocation6 + $0x270] sm:$0xff]
    %v1625 = vld [vmem:[#allocation6 + $0x278] sm:$0xf]
    %v1626 = vld [vmem:[#allocation6 + $0x27c] sm:$0xff]
    %v1627 = vld [vmem:[#allocation6 + $0x284] sm:$0xf]
    %v1628 = vld [vmem:[#allocation6 + $0x288] sm:$0xff]
    %v1629 = vld [vmem:[#allocation6 + $0x290] sm:$0xf]
    %v1630 = vld [vmem:[#allocation6 + $0x294] sm:$0xff]
    %v1631 = vld [vmem:[#allocation6 + $0x29c] sm:$0xf]
    %v1632 = vld [vmem:[#allocation6 + $0x2a0] sm:$0xff]
    %v1633 = vld [vmem:[#allocation6 + $0x2a8] sm:$0xf]
    %v1634 = vld [vmem:[#allocation6 + $0x2ac] sm:$0xff]
    %v1635 = vld [vmem:[#allocation6 + $0x2b4] sm:$0xf]
    %v1636 = vld [vmem:[#allocation6 + $0x2b8] sm:$0xff]
    %v1637 = vld [vmem:[#allocation6 + $0x2c0] sm:$0xf]
    %v1638 = vld [vmem:[#allocation6 + $0x2c4] sm:$0xff]
    %v1639 = vld [vmem:[#allocation6 + $0x2cc] sm:$0xf]
    %v1640 = vld [vmem:[#allocation6 + $0x2d0] sm:$0xff]
    %v1641 = vld [vmem:[#allocation6 + $0x2d8] sm:$0xf]
    %v1642 = vld [vmem:[#allocation6 + $0x2dc] sm:$0xff]
    %v1643 = vld [vmem:[#allocation6 + $0x2e4] sm:$0xf]
    %v1644 = vld [vmem:[#allocation6 + $0x2e8] sm:$0xff]
    %v1645 = vld [vmem:[#allocation6 + $0x2f0] sm:$0xf]
    %v1646 = vld [vmem:[#allocation6 + $0x2f4] sm:$0xff]
    %v1647 = vld [vmem:[#allocation6 + $0x2fc] sm:$0xf]
    %v1648 = vld [vmem:[%s6] sm:$0x7]
    %v1650 = vlaneseq
    %v1651 = vshrl.u32 %v1650, 7
    %v1652 = vsub.s32 0, %v1651
    %v1653 = vrot.slane %v1648, %v1652
    %v1654 = vlaneseq
    %v1655 = vshrl.u32 %v1654, 7
    %v1656 = vsub.s32 1, %v1655
    %v1657 = vrot.slane %v1648, %v1656
    %v1658 = vlaneseq
    %v1659 = vshrl.u32 %v1658, 7
    %v1660 = vsub.s32 2, %v1659
    %v1661 = vrot.slane %v1648, %v1660
    %v1793 = vunpack.c.l.b16 %v1520
    %v1794 = vunpack.c.h.b16 %v1520
    %v1795 = vunpack.c.l.b16 %v1521
    %v1796 = vunpack.c.l.b16 %v1522
    %v1797 = vunpack.c.h.b16 %v1522
    %v1798 = vunpack.c.l.b16 %v1523
    %v1799 = vunpack.c.l.b16 %v1524
    %v1800 = vunpack.c.h.b16 %v1524
    %v1801 = vunpack.c.l.b16 %v1525
    %v1802 = vunpack.c.l.b16 %v1526
    %v1803 = vunpack.c.h.b16 %v1526
    %v1804 = vunpack.c.l.b16 %v1527
    %v1805 = vunpack.c.l.b16 %v1528
    %v1806 = vunpack.c.h.b16 %v1528
    %v1807 = vunpack.c.l.b16 %v1529
    %v1808 = vunpack.c.l.b16 %v1530
    %v1809 = vunpack.c.h.b16 %v1530
    %v1810 = vunpack.c.l.b16 %v1531
    %v1811 = vunpack.c.l.b16 %v1532
    %v1812 = vunpack.c.h.b16 %v1532
    %v1813 = vunpack.c.l.b16 %v1533
    %v1814 = vunpack.c.l.b16 %v1534
    %v1815 = vunpack.c.h.b16 %v1534
    %v1816 = vunpack.c.l.b16 %v1535
    %v1817 = vunpack.c.l.b16 %v1536
    %v1818 = vunpack.c.h.b16 %v1536
    %v1819 = vunpack.c.l.b16 %v1537
    %v1820 = vunpack.c.l.b16 %v1538
    %v1821 = vunpack.c.h.b16 %v1538
    %v1822 = vunpack.c.l.b16 %v1539
    %v1823 = vunpack.c.l.b16 %v1540
    %v1824 = vunpack.c.h.b16 %v1540
    %v1825 = vunpack.c.l.b16 %v1541
    %v1826 = vunpack.c.l.b16 %v1542
    %v1827 = vunpack.c.h.b16 %v1542
    %v1828 = vunpack.c.l.b16 %v1543
    %v1829 = vunpack.c.l.b16 %v1544
    %v1830 = vunpack.c.h.b16 %v1544
    %v1831 = vunpack.c.l.b16 %v1545
    %v1832 = vunpack.c.l.b16 %v1546
    %v1833 = vunpack.c.h.b16 %v1546
    %v1834 = vunpack.c.l.b16 %v1547
    %v1835 = vunpack.c.l.b16 %v1548
    %v1836 = vunpack.c.h.b16 %v1548
    %v1837 = vunpack.c.l.b16 %v1549
    %v1838 = vunpack.c.l.b16 %v1550
    %v1839 = vunpack.c.h.b16 %v1550
    %v1840 = vunpack.c.l.b16 %v1551
    %v1841 = vunpack.c.l.b16 %v1552
    %v1842 = vunpack.c.h.b16 %v1552
    %v1843 = vunpack.c.l.b16 %v1553
    %v1844 = vunpack.c.l.b16 %v1554
    %v1845 = vunpack.c.h.b16 %v1554
    %v1846 = vunpack.c.l.b16 %v1555
    %v1847 = vunpack.c.l.b16 %v1556
    %v1848 = vunpack.c.h.b16 %v1556
    %v1849 = vunpack.c.l.b16 %v1557
    %v1850 = vunpack.c.l.b16 %v1558
    %v1851 = vunpack.c.h.b16 %v1558
    %v1852 = vunpack.c.l.b16 %v1559
    %v1853 = vunpack.c.l.b16 %v1560
    %v1854 = vunpack.c.h.b16 %v1560
    %v1855 = vunpack.c.l.b16 %v1561
    %v1856 = vunpack.c.l.b16 %v1562
    %v1857 = vunpack.c.h.b16 %v1562
    %v1858 = vunpack.c.l.b16 %v1563
    %v1859 = vunpack.c.l.b16 %v1564
    %v1860 = vunpack.c.h.b16 %v1564
    %v1861 = vunpack.c.l.b16 %v1565
    %v1862 = vunpack.c.l.b16 %v1566
    %v1863 = vunpack.c.h.b16 %v1566
    %v1864 = vunpack.c.l.b16 %v1567
    %v1865 = vunpack.c.l.b16 %v1568
    %v1866 = vunpack.c.h.b16 %v1568
    %v1867 = vunpack.c.l.b16 %v1569
    %v1868 = vunpack.c.l.b16 %v1570
    %v1869 = vunpack.c.h.b16 %v1570
    %v1870 = vunpack.c.l.b16 %v1571
    %v1871 = vunpack.c.l.b16 %v1572
    %v1872 = vunpack.c.h.b16 %v1572
    %v1873 = vunpack.c.l.b16 %v1573
    %v1874 = vunpack.c.l.b16 %v1574
    %v1875 = vunpack.c.h.b16 %v1574
    %v1876 = vunpack.c.l.b16 %v1575
    %v1877 = vunpack.c.l.b16 %v1576
    %v1878 = vunpack.c.h.b16 %v1576
    %v1879 = vunpack.c.l.b16 %v1577
    %v1880 = vunpack.c.l.b16 %v1578
    %v1881 = vunpack.c.h.b16 %v1578
    %v1882 = vunpack.c.l.b16 %v1579
    %v1883 = vunpack.c.l.b16 %v1580
    %v1884 = vunpack.c.h.b16 %v1580
    %v1885 = vunpack.c.l.b16 %v1581
    %v1886 = vunpack.c.l.b16 %v1582
    %v1887 = vunpack.c.h.b16 %v1582
    %v1888 = vunpack.c.l.b16 %v1583
    %v1889 = vunpack.c.l.b16 %v1584
    %v1890 = vunpack.c.h.b16 %v1584
    %v1891 = vunpack.c.l.b16 %v1585
    %v1892 = vunpack.c.l.b16 %v1586
    %v1893 = vunpack.c.h.b16 %v1586
    %v1894 = vunpack.c.l.b16 %v1587
    %v1895 = vunpack.c.l.b16 %v1588
    %v1896 = vunpack.c.h.b16 %v1588
    %v1897 = vunpack.c.l.b16 %v1589
    %v1898 = vunpack.c.l.b16 %v1590
    %v1899 = vunpack.c.h.b16 %v1590
    %v1900 = vunpack.c.l.b16 %v1591
    %v1901 = vunpack.c.l.b16 %v1592
    %v1902 = vunpack.c.h.b16 %v1592
    %v1903 = vunpack.c.l.b16 %v1593
    %v1904 = vunpack.c.l.b16 %v1594
    %v1905 = vunpack.c.h.b16 %v1594
    %v1906 = vunpack.c.l.b16 %v1595
    %v1907 = vunpack.c.l.b16 %v1596
    %v1908 = vunpack.c.h.b16 %v1596
    %v1909 = vunpack.c.l.b16 %v1597
    %v1910 = vunpack.c.l.b16 %v1598
    %v1911 = vunpack.c.h.b16 %v1598
    %v1912 = vunpack.c.l.b16 %v1599
    %v1913 = vunpack.c.l.b16 %v1600
    %v1914 = vunpack.c.h.b16 %v1600
    %v1915 = vunpack.c.l.b16 %v1601
    %v1916 = vunpack.c.l.b16 %v1602
    %v1917 = vunpack.c.h.b16 %v1602
    %v1918 = vunpack.c.l.b16 %v1603
    %v1919 = vunpack.c.l.b16 %v1604
    %v1920 = vunpack.c.h.b16 %v1604
    %v1921 = vunpack.c.l.b16 %v1605
    %v1922 = vunpack.c.l.b16 %v1606
    %v1923 = vunpack.c.h.b16 %v1606
    %v1924 = vunpack.c.l.b16 %v1607
    %v1925 = vunpack.c.l.b16 %v1608
    %v1926 = vunpack.c.h.b16 %v1608
    %v1927 = vunpack.c.l.b16 %v1609
    %v1928 = vunpack.c.l.b16 %v1610
    %v1929 = vunpack.c.h.b16 %v1610
    %v1930 = vunpack.c.l.b16 %v1611
    %v1931 = vunpack.c.l.b16 %v1612
    %v1932 = vunpack.c.h.b16 %v1612
    %v1933 = vunpack.c.l.b16 %v1613
    %v1934 = vunpack.c.l.b16 %v1614
    %v1935 = vunpack.c.h.b16 %v1614
    %v1936 = vunpack.c.l.b16 %v1615
    %v1937 = vunpack.c.l.b16 %v1616
    %v1938 = vunpack.c.h.b16 %v1616
    %v1939 = vunpack.c.l.b16 %v1617
    %v1940 = vunpack.c.l.b16 %v1618
    %v1941 = vunpack.c.h.b16 %v1618
    %v1942 = vunpack.c.l.b16 %v1619
    %v1943 = vunpack.c.l.b16 %v1620
    %v1944 = vunpack.c.h.b16 %v1620
    %v1945 = vunpack.c.l.b16 %v1621
    %v1946 = vunpack.c.l.b16 %v1622
    %v1947 = vunpack.c.h.b16 %v1622
    %v1948 = vunpack.c.l.b16 %v1623
    %v1949 = vunpack.c.l.b16 %v1624
    %v1950 = vunpack.c.h.b16 %v1624
    %v1951 = vunpack.c.l.b16 %v1625
    %v1952 = vunpack.c.l.b16 %v1626
    %v1953 = vunpack.c.h.b16 %v1626
    %v1954 = vunpack.c.l.b16 %v1627
    %v1955 = vunpack.c.l.b16 %v1628
    %v1956 = vunpack.c.h.b16 %v1628
    %v1957 = vunpack.c.l.b16 %v1629
    %v1958 = vunpack.c.l.b16 %v1630
    %v1959 = vunpack.c.h.b16 %v1630
    %v1960 = vunpack.c.l.b16 %v1631
    %v1961 = vunpack.c.l.b16 %v1632
    %v1962 = vunpack.c.h.b16 %v1632
    %v1963 = vunpack.c.l.b16 %v1633
    %v1964 = vunpack.c.l.b16 %v1634
    %v1965 = vunpack.c.h.b16 %v1634
    %v1966 = vunpack.c.l.b16 %v1635
    %v1967 = vunpack.c.l.b16 %v1636
    %v1968 = vunpack.c.h.b16 %v1636
    %v1969 = vunpack.c.l.b16 %v1637
    %v1970 = vunpack.c.l.b16 %v1638
    %v1971 = vunpack.c.h.b16 %v1638
    %v1972 = vunpack.c.l.b16 %v1639
    %v1973 = vunpack.c.l.b16 %v1640
    %v1974 = vunpack.c.h.b16 %v1640
    %v1975 = vunpack.c.l.b16 %v1641
    %v1976 = vunpack.c.l.b16 %v1642
    %v1977 = vunpack.c.h.b16 %v1642
    %v1978 = vunpack.c.l.b16 %v1643
    %v1979 = vunpack.c.l.b16 %v1644
    %v1980 = vunpack.c.h.b16 %v1644
    %v1981 = vunpack.c.l.b16 %v1645
    %v1982 = vunpack.c.l.b16 %v1646
    %v1983 = vunpack.c.h.b16 %v1646
    %v1984 = vunpack.c.l.b16 %v1647
    %v1985 = vpack.c.b16 %v1796, %v1793
    %v1986 = vpack.c.b16 %v1797, %v1794
    %v1987 = vpack.c.b16 %v1798, %v1795
    %v1988 = vpack.c.b16 %v1802, %v1799
    %v1989 = vpack.c.b16 %v1803, %v1800
    %v1990 = vpack.c.b16 %v1804, %v1801
    %v1991 = vpack.c.b16 %v1808, %v1805
    %v1992 = vpack.c.b16 %v1809, %v1806
    %v1993 = vpack.c.b16 %v1810, %v1807
    %v1994 = vpack.c.b16 %v1814, %v1811
    %v1995 = vpack.c.b16 %v1815, %v1812
    %v1996 = vpack.c.b16 %v1816, %v1813
    %v1997 = vpack.c.b16 %v1820, %v1817
    %v1998 = vpack.c.b16 %v1821, %v1818
    %v1999 = vpack.c.b16 %v1822, %v1819
    %v2000 = vpack.c.b16 %v1826, %v1823
    %v2001 = vpack.c.b16 %v1827, %v1824
    %v2002 = vpack.c.b16 %v1828, %v1825
    %v2003 = vpack.c.b16 %v1832, %v1829
    %v2004 = vpack.c.b16 %v1833, %v1830
    %v2005 = vpack.c.b16 %v1834, %v1831
    %v2006 = vpack.c.b16 %v1838, %v1835
    %v2007 = vpack.c.b16 %v1839, %v1836
    %v2008 = vpack.c.b16 %v1840, %v1837
    %v2009 = vpack.c.b16 %v1844, %v1841
    %v2010 = vpack.c.b16 %v1845, %v1842
    %v2011 = vpack.c.b16 %v1846, %v1843
    %v2012 = vpack.c.b16 %v1850, %v1847
    %v2013 = vpack.c.b16 %v1851, %v1848
    %v2014 = vpack.c.b16 %v1852, %v1849
    %v2015 = vpack.c.b16 %v1856, %v1853
    %v2016 = vpack.c.b16 %v1857, %v1854
    %v2017 = vpack.c.b16 %v1858, %v1855
    %v2018 = vpack.c.b16 %v1862, %v1859
    %v2019 = vpack.c.b16 %v1863, %v1860
    %v2020 = vpack.c.b16 %v1864, %v1861
    %v2021 = vpack.c.b16 %v1868, %v1865
    %v2022 = vpack.c.b16 %v1869, %v1866
    %v2023 = vpack.c.b16 %v1870, %v1867
    %v2024 = vpack.c.b16 %v1874, %v1871
    %v2025 = vpack.c.b16 %v1875, %v1872
    %v2026 = vpack.c.b16 %v1876, %v1873
    %v2027 = vpack.c.b16 %v1880, %v1877
    %v2028 = vpack.c.b16 %v1881, %v1878
    %v2029 = vpack.c.b16 %v1882, %v1879
    %v2030 = vpack.c.b16 %v1886, %v1883
    %v2031 = vpack.c.b16 %v1887, %v1884
    %v2032 = vpack.c.b16 %v1888, %v1885
    %v2033 = vpack.c.b16 %v1892, %v1889
    %v2034 = vpack.c.b16 %v1893, %v1890
    %v2035 = vpack.c.b16 %v1894, %v1891
    %v2036 = vpack.c.b16 %v1898, %v1895
    %v2037 = vpack.c.b16 %v1899, %v1896
    %v2038 = vpack.c.b16 %v1900, %v1897
    %v2039 = vpack.c.b16 %v1904, %v1901
    %v2040 = vpack.c.b16 %v1905, %v1902
    %v2041 = vpack.c.b16 %v1906, %v1903
    %v2042 = vpack.c.b16 %v1910, %v1907
    %v2043 = vpack.c.b16 %v1911, %v1908
    %v2044 = vpack.c.b16 %v1912, %v1909
    %v2045 = vpack.c.b16 %v1916, %v1913
    %v2046 = vpack.c.b16 %v1917, %v1914
    %v2047 = vpack.c.b16 %v1918, %v1915
    %v2048 = vpack.c.b16 %v1922, %v1919
    %v2049 = vpack.c.b16 %v1923, %v1920
    %v2050 = vpack.c.b16 %v1924, %v1921
    %v2051 = vpack.c.b16 %v1928, %v1925
    %v2052 = vpack.c.b16 %v1929, %v1926
    %v2053 = vpack.c.b16 %v1930, %v1927
    %v2054 = vpack.c.b16 %v1934, %v1931
    %v2055 = vpack.c.b16 %v1935, %v1932
    %v2056 = vpack.c.b16 %v1936, %v1933
    %v2057 = vpack.c.b16 %v1940, %v1937
    %v2058 = vpack.c.b16 %v1941, %v1938
    %v2059 = vpack.c.b16 %v1942, %v1939
    %v2060 = vpack.c.b16 %v1946, %v1943
    %v2061 = vpack.c.b16 %v1947, %v1944
    %v2062 = vpack.c.b16 %v1948, %v1945
    %v2063 = vpack.c.b16 %v1952, %v1949
    %v2064 = vpack.c.b16 %v1953, %v1950
    %v2065 = vpack.c.b16 %v1954, %v1951
    %v2066 = vpack.c.b16 %v1958, %v1955
    %v2067 = vpack.c.b16 %v1959, %v1956
    %v2068 = vpack.c.b16 %v1960, %v1957
    %v2069 = vpack.c.b16 %v1964, %v1961
    %v2070 = vpack.c.b16 %v1965, %v1962
    %v2071 = vpack.c.b16 %v1966, %v1963
    %v2072 = vpack.c.b16 %v1970, %v1967
    %v2073 = vpack.c.b16 %v1971, %v1968
    %v2074 = vpack.c.b16 %v1972, %v1969
    %v2075 = vpack.c.b16 %v1976, %v1973
    %v2076 = vpack.c.b16 %v1977, %v1974
    %v2077 = vpack.c.b16 %v1978, %v1975
    %v2078 = vpack.c.b16 %v1982, %v1979
    %v2079 = vpack.c.b16 %v1983, %v1980
    %v2080 = vpack.c.b16 %v1984, %v1981
    %2177 = vmatprep.subr.bf16.mxu0 %v1986
    %2178 = vmatpush1.bf16.msra.mxu0 %v1985
    %2179 = vmatprep.subr.bf16.mxu0 %v1989
    %2180 = vmatpush1.bf16.msra.mxu0 %v1988
    %2181 = vmatprep.subr.bf16.mxu0 %v1992
    %2182 = vmatpush1.bf16.msra.mxu0 %v1991
    %2183 = vmatprep.subr.bf16.mxu0 %v1995
    %2184 = vmatpush1.bf16.msra.mxu0 %v1994
    %2185 = vmatprep.subr.bf16.mxu0 %v1998
    %2186 = vmatpush1.bf16.msra.mxu0 %v1997
    %2187 = vmatprep.subr.bf16.mxu0 %v2001
    %2188 = vmatpush1.bf16.msra.mxu0 %v2000
    %2189 = vmatprep.subr.bf16.mxu0 %v2004
    %2190 = vmatpush1.bf16.msra.mxu0 %v2003
    %2191 = vmatprep.subr.bf16.mxu0 %v2007
    %2192 = vmatpush1.bf16.msra.mxu0 %v2006
    %2193 = vmatprep.subr.bf16.mxu0 %v2010
    %2194 = vmatpush1.bf16.msra.mxu0 %v2009
    %2195 = vmatprep.subr.bf16.mxu0 %v2013
    %2196 = vmatpush1.bf16.msra.mxu0 %v2012
    %2197 = vmatprep.subr.bf16.mxu0 %v2016
    %2198 = vmatpush1.bf16.msra.mxu0 %v2015
    %2199 = vmatprep.subr.bf16.mxu0 %v2019
    %2200 = vmatpush1.bf16.msra.mxu0 %v2018
    %2201 = vmatprep.subr.bf16.mxu0 %v2022
    %2202 = vmatpush1.bf16.msra.mxu0 %v2021
    %2203 = vmatprep.subr.bf16.mxu0 %v2025
    %2204 = vmatpush1.bf16.msra.mxu0 %v2024
    %2205 = vmatprep.subr.bf16.mxu0 %v2028
    %2206 = vmatpush1.bf16.msra.mxu0 %v2027
    %2207 = vmatprep.subr.bf16.mxu0 %v2031
    %2208 = vmatpush1.bf16.msra.mxu0 %v2030
    %2209 = vmatprep.mubr.bf16.mxu0 %v692
    %2210 = vmatmul.mubr.bf16.gmra.mrb[0].mxu0 %v691
    %v2211 = vpop.f32.mrb[0].mxu0
    %v2212 = vadd.f32 %v1653, %v2211
    %v2213 = vpop.f32.mrb[0].mxu0
    %v2214 = vadd.f32 %v1657, %v2213
    %v2215 = vpop.f32.mrb[0].mxu0
    %v2216 = vpop.f32.mrb[0].mxu0
    %2217 = vdwg.mxu0
    %2218 = vmatprep.subr.bf16.mxu0 %v2034
    %2219 = vmatpush1.bf16.msra.mxu0 %v2033
    %2220 = vmatprep.subr.bf16.mxu0 %v2037
    %2221 = vmatpush1.bf16.msra.mxu0 %v2036
    %2222 = vmatprep.subr.bf16.mxu0 %v2040
    %2223 = vmatpush1.bf16.msra.mxu0 %v2039
    %2224 = vmatprep.subr.bf16.mxu0 %v2043
    %2225 = vmatpush1.bf16.msra.mxu0 %v2042
    %2226 = vmatprep.subr.bf16.mxu0 %v2046
    %2227 = vmatpush1.bf16.msra.mxu0 %v2045
    %2228 = vmatprep.subr.bf16.mxu0 %v2049
    %2229 = vmatpush1.bf16.msra.mxu0 %v2048
    %2230 = vmatprep.subr.bf16.mxu0 %v2052
    %2231 = vmatpush1.bf16.msra.mxu0 %v2051
    %2232 = vmatprep.subr.bf16.mxu0 %v2055
    %2233 = vmatpush1.bf16.msra.mxu0 %v2054
    %2234 = vmatprep.subr.bf16.mxu0 %v2058
    %2235 = vmatpush1.bf16.msra.mxu0 %v2057
    %2236 = vmatprep.subr.bf16.mxu0 %v2061
    %2237 = vmatpush1.bf16.msra.mxu0 %v2060
    %2238 = vmatprep.subr.bf16.mxu0 %v2064
    %2239 = vmatpush1.bf16.msra.mxu0 %v2063
    %2240 = vmatprep.subr.bf16.mxu0 %v2067
    %2241 = vmatpush1.bf16.msra.mxu0 %v2066
    %2242 = vmatprep.subr.bf16.mxu0 %v2070
    %2243 = vmatpush1.bf16.msra.mxu0 %v2069
    %2244 = vmatprep.subr.bf16.mxu0 %v2073
    %2245 = vmatpush1.bf16.msra.mxu0 %v2072
    %2246 = vmatprep.subr.bf16.mxu0 %v2076
    %2247 = vmatpush1.bf16.msra.mxu0 %v2075
    %2248 = vmatprep.subr.bf16.mxu0 %v2079
    %2249 = vmatpush1.bf16.msra.mxu0 %v2078
    %2250 = vmatprep.mubr.bf16.mxu0 %v694
    %2251 = vmatmul.mubr.bf16.gmra.mrb[0].mxu0 %v693
    %v2252 = vpop.f32.mrb[0].mxu0
    %v2253 = vadd.f32 %v2212, %v2252
    %v2254 = vpop.f32.mrb[0].mxu0
    %v2255 = vadd.f32 %v2214, %v2254
    %v2256 = vpop.f32.mrb[0].mxu0
    %v2257 = vpop.f32.mrb[0].mxu0
    %2258 = vdwg.mxu0
    %2259 = vmatprep.subr.bf16.mxu0 0
    %2260 = vmatpush1.bf16.msra.mxu0 %v1987
    %2261 = vmatprep.subr.bf16.mxu0 0
    %2262 = vmatpush1.bf16.msra.mxu0 %v1990
    %2263 = vmatprep.subr.bf16.mxu0 0
    %2264 = vmatpush1.bf16.msra.mxu0 %v1993
    %2265 = vmatprep.subr.bf16.mxu0 0
    %2266 = vmatpush1.bf16.msra.mxu0 %v1996
    %2267 = vmatprep.subr.bf16.mxu0 0
    %2268 = vmatpush1.bf16.msra.mxu0 %v1999
    %2269 = vmatprep.subr.bf16.mxu0 0
    %2270 = vmatpush1.bf16.msra.mxu0 %v2002
    %2271 = vmatprep.subr.bf16.mxu0 0
    %2272 = vmatpush1.bf16.msra.mxu0 %v2005
    %2273 = vmatprep.subr.bf16.mxu0 0
    %2274 = vmatpush1.bf16.msra.mxu0 %v2008
    %2275 = vmatprep.subr.bf16.mxu0 0
    %2276 = vmatpush1.bf16.msra.mxu0 %v2011
    %2277 = vmatprep.subr.bf16.mxu0 0
    %2278 = vmatpush1.bf16.msra.mxu0 %v2014
    %2279 = vmatprep.subr.bf16.mxu0 0
    %2280 = vmatpush1.bf16.msra.mxu0 %v2017
    %2281 = vmatprep.subr.bf16.mxu0 0
    %2282 = vmatpush1.bf16.msra.mxu0 %v2020
    %2283 = vmatprep.subr.bf16.mxu0 0
    %2284 = vmatpush1.bf16.msra.mxu0 %v2023
    %2285 = vmatprep.subr.bf16.mxu0 0
    %2286 = vmatpush1.bf16.msra.mxu0 %v2026
    %2287 = vmatprep.subr.bf16.mxu0 0
    %2288 = vmatpush1.bf16.msra.mxu0 %v2029
    %2289 = vmatprep.subr.bf16.mxu0 0
    %2290 = vmatpush1.bf16.msra.mxu0 %v2032
    %2291 = vmatprep.mubr.bf16.mxu0 %v692
    %2292 = vmatmul.mubr.bf16.gmra.mrb[0].mxu0 %v691
    %v2293 = vpop.f32.mrb[0].mxu0
    %v2294 = vadd.f32 %v1661, %v2293
    %v2295 = vpop.f32.mrb[0].mxu0
    %v2296 = vpop.f32.mrb[0].mxu0
    %v2297 = vpop.f32.mrb[0].mxu0
    %2298 = vdwg.mxu0
    %2299 = vmatprep.subr.bf16.mxu0 0
    %2300 = vmatpush1.bf16.msra.mxu0 %v2035
    %2301 = vmatprep.subr.bf16.mxu0 0
    %2302 = vmatpush1.bf16.msra.mxu0 %v2038
    %2303 = vmatprep.subr.bf16.mxu0 0
    %2304 = vmatpush1.bf16.msra.mxu0 %v2041
    %2305 = vmatprep.subr.bf16.mxu0 0
    %2306 = vmatpush1.bf16.msra.mxu0 %v2044
    %2307 = vmatprep.subr.bf16.mxu0 0
    %2308 = vmatpush1.bf16.msra.mxu0 %v2047
    %2309 = vmatprep.subr.bf16.mxu0 0
    %2310 = vmatpush1.bf16.msra.mxu0 %v2050
    %2311 = vmatprep.subr.bf16.mxu0 0
    %2312 = vmatpush1.bf16.msra.mxu0 %v2053
    %2313 = vmatprep.subr.bf16.mxu0 0
    %2314 = vmatpush1.bf16.msra.mxu0 %v2056
    %2315 = vmatprep.subr.bf16.mxu0 0
    %2316 = vmatpush1.bf16.msra.mxu0 %v2059
    %2317 = vmatprep.subr.bf16.mxu0 0
    %2318 = vmatpush1.bf16.msra.mxu0 %v2062
    %2319 = vmatprep.subr.bf16.mxu0 0
    %2320 = vmatpush1.bf16.msra.mxu0 %v2065
    %2321 = vmatprep.subr.bf16.mxu0 0
    %2322 = vmatpush1.bf16.msra.mxu0 %v2068
    %2323 = vmatprep.subr.bf16.mxu0 0
    %2324 = vmatpush1.bf16.msra.mxu0 %v2071
    %2325 = vmatprep.subr.bf16.mxu0 0
    %2326 = vmatpush1.bf16.msra.mxu0 %v2074
    %2327 = vmatprep.subr.bf16.mxu0 0
    %2328 = vmatpush1.bf16.msra.mxu0 %v2077
    %2329 = vmatprep.subr.bf16.mxu0 0
    %2330 = vmatpush1.bf16.msra.mxu0 %v2080
    %2331 = vmatprep.mubr.bf16.mxu0 %v694
    %2332 = vmatmul.mubr.bf16.gmra.mrb[0].mxu0 %v693
    %v2333 = vpop.f32.mrb[0].mxu0
    %v2334 = vadd.f32 %v2294, %v2333
    %v2335 = vpop.f32.mrb[0].mxu0
    %v2336 = vpop.f32.mrb[0].mxu0
    %v2337 = vpop.f32.mrb[0].mxu0
    %2338 = vdwg.mxu0
    %v2339 = vmax.f32 %v2253, 0.0
    %v2340 = vmax.f32 %v2255, 0.0
    %v2341 = vmax.f32 %v2334, 0.0
    %v2342 = vpack.c.bf16 %v2339, %v2339
    %v2343 = vpack.c.bf16 %v2340, %v2340
    %v2344 = vpack.c.bf16 %v2341, %v2341
    %v2345 = vld [vmem:[#allocation7] sm:$0xf]
    %v2346 = vld [vmem:[#allocation7 + $0x4] sm:$0xf]
    %v2347 = vld [vmem:[#allocation7 + $0x8] sm:$0xf]
    %v2348 = vld [vmem:[#allocation7 + $0xc] sm:$0xf]
    %v2349 = vld [vmem:[#allocation7 + $0x10] sm:$0xf]
    %v2350 = vld [vmem:[#allocation7 + $0x14] sm:$0xf]
    %v2351 = vld [vmem:[#allocation7 + $0x18] sm:$0xf]
    %v2352 = vld [vmem:[#allocation7 + $0x1c] sm:$0xf]
    %v2353 = vld [vmem:[#allocation7 + $0x20] sm:$0xf]
    %v2354 = vld [vmem:[#allocation7 + $0x24] sm:$0xf]
    %v2355 = vld [vmem:[#allocation7 + $0x28] sm:$0xf]
    %v2356 = vld [vmem:[#allocation7 + $0x2c] sm:$0xf]
    %v2357 = vld [vmem:[#allocation7 + $0x30] sm:$0xf]
    %v2358 = vld [vmem:[#allocation7 + $0x34] sm:$0xf]
    %v2359 = vld [vmem:[#allocation7 + $0x38] sm:$0xf]
    %v2360 = vld [vmem:[#allocation7 + $0x3c] sm:$0xf]
    %v2361 = vld [vmem:[#allocation7 + $0x40] sm:$0xf]
    %v2362 = vld [vmem:[#allocation7 + $0x44] sm:$0xf]
    %v2363 = vld [vmem:[#allocation7 + $0x48] sm:$0xf]
    %v2364 = vld [vmem:[#allocation7 + $0x4c] sm:$0xf]
    %v2365 = vld [vmem:[#allocation7 + $0x50] sm:$0xf]
    %v2366 = vld [vmem:[#allocation7 + $0x54] sm:$0xf]
    %v2367 = vld [vmem:[#allocation7 + $0x58] sm:$0xf]
    %v2368 = vld [vmem:[#allocation7 + $0x5c] sm:$0xf]
    %v2369 = vld [vmem:[#allocation7 + $0x60] sm:$0xf]
    %v2370 = vld [vmem:[#allocation7 + $0x64] sm:$0xf]
    %v2371 = vld [vmem:[#allocation7 + $0x68] sm:$0xf]
    %v2372 = vld [vmem:[#allocation7 + $0x6c] sm:$0xf]
    %v2373 = vld [vmem:[#allocation7 + $0x70] sm:$0xf]
    %v2374 = vld [vmem:[#allocation7 + $0x74] sm:$0xf]
    %v2375 = vld [vmem:[#allocation7 + $0x78] sm:$0xf]
    %v2376 = vld [vmem:[#allocation7 + $0x7c] sm:$0xf]
    %v2377 = vld [vmem:[#allocation7 + $0x80] sm:$0xf]
    %v2378 = vld [vmem:[#allocation7 + $0x84] sm:$0xf]
    %v2379 = vld [vmem:[#allocation7 + $0x88] sm:$0xf]
    %v2380 = vld [vmem:[#allocation7 + $0x8c] sm:$0xf]
    %v2381 = vld [vmem:[#allocation7 + $0x90] sm:$0xf]
    %v2382 = vld [vmem:[#allocation7 + $0x94] sm:$0xf]
    %v2383 = vld [vmem:[#allocation7 + $0x98] sm:$0xf]
    %v2384 = vld [vmem:[#allocation7 + $0x9c] sm:$0xf]
    %v2385 = vld [vmem:[#allocation7 + $0xa0] sm:$0xf]
    %v2386 = vld [vmem:[#allocation7 + $0xa4] sm:$0xf]
    %v2387 = vld [vmem:[#allocation7 + $0xa8] sm:$0xf]
    %v2388 = vld [vmem:[#allocation7 + $0xac] sm:$0xf]
    %v2389 = vld [vmem:[#allocation7 + $0xb0] sm:$0xf]
    %v2390 = vld [vmem:[#allocation7 + $0xb4] sm:$0xf]
    %v2391 = vld [vmem:[#allocation7 + $0xb8] sm:$0xf]
    %v2392 = vld [vmem:[#allocation7 + $0xbc] sm:$0xf]
    %v2393 = vld [vmem:[#allocation7 + $0xc0] sm:$0xf]
    %v2394 = vld [vmem:[#allocation7 + $0xc4] sm:$0xf]
    %v2395 = vld [vmem:[#allocation7 + $0xc8] sm:$0xf]
    %v2396 = vld [vmem:[#allocation7 + $0xcc] sm:$0xf]
    %v2397 = vld [vmem:[#allocation7 + $0xd0] sm:$0xf]
    %v2398 = vld [vmem:[#allocation7 + $0xd4] sm:$0xf]
    %v2399 = vld [vmem:[#allocation7 + $0xd8] sm:$0xf]
    %v2400 = vld [vmem:[#allocation7 + $0xdc] sm:$0xf]
    %v2401 = vld [vmem:[#allocation7 + $0xe0] sm:$0xf]
    %v2402 = vld [vmem:[#allocation7 + $0xe4] sm:$0xf]
    %v2403 = vld [vmem:[#allocation7 + $0xe8] sm:$0xf]
    %v2404 = vld [vmem:[#allocation7 + $0xec] sm:$0xf]
    %v2405 = vld [vmem:[#allocation7 + $0xf0] sm:$0xf]
    %v2406 = vld [vmem:[#allocation7 + $0xf4] sm:$0xf]
    %v2407 = vld [vmem:[#allocation7 + $0xf8] sm:$0xf]
    %v2408 = vld [vmem:[#allocation7 + $0xfc] sm:$0xf]
    %v2409 = vld [vmem:[#allocation7 + $0x100] sm:$0xf]
    %v2410 = vld [vmem:[#allocation7 + $0x104] sm:$0xf]
    %v2411 = vld [vmem:[#allocation7 + $0x108] sm:$0xf]
    %v2412 = vld [vmem:[#allocation7 + $0x10c] sm:$0xf]
    %v2413 = vld [vmem:[#allocation7 + $0x110] sm:$0xf]
    %v2414 = vld [vmem:[#allocation7 + $0x114] sm:$0xf]
    %v2415 = vld [vmem:[#allocation7 + $0x118] sm:$0xf]
    %v2416 = vld [vmem:[#allocation7 + $0x11c] sm:$0xf]
    %v2417 = vld [vmem:[#allocation7 + $0x120] sm:$0xf]
    %v2418 = vld [vmem:[#allocation7 + $0x124] sm:$0xf]
    %v2419 = vld [vmem:[#allocation7 + $0x128] sm:$0xf]
    %v2420 = vld [vmem:[#allocation7 + $0x12c] sm:$0xf]
    %v2421 = vld [vmem:[#allocation7 + $0x130] sm:$0xf]
    %v2422 = vld [vmem:[#allocation7 + $0x134] sm:$0xf]
    %v2423 = vld [vmem:[#allocation7 + $0x138] sm:$0xf]
    %v2424 = vld [vmem:[#allocation7 + $0x13c] sm:$0xf]
    %v2425 = vld [vmem:[#allocation7 + $0x140] sm:$0xf]
    %v2426 = vld [vmem:[#allocation7 + $0x144] sm:$0xf]
    %v2427 = vld [vmem:[#allocation7 + $0x148] sm:$0xf]
    %v2428 = vld [vmem:[#allocation7 + $0x14c] sm:$0xf]
    %v2429 = vld [vmem:[#allocation7 + $0x150] sm:$0xf]
    %v2430 = vld [vmem:[#allocation7 + $0x154] sm:$0xf]
    %v2431 = vld [vmem:[#allocation7 + $0x158] sm:$0xf]
    %v2432 = vld [vmem:[#allocation7 + $0x15c] sm:$0xf]
    %v2433 = vld [vmem:[#allocation7 + $0x160] sm:$0xf]
    %v2434 = vld [vmem:[#allocation7 + $0x164] sm:$0xf]
    %v2435 = vld [vmem:[#allocation7 + $0x168] sm:$0xf]
    %v2436 = vld [vmem:[#allocation7 + $0x16c] sm:$0xf]
    %v2437 = vld [vmem:[#allocation7 + $0x170] sm:$0xf]
    %v2438 = vld [vmem:[#allocation7 + $0x174] sm:$0xf]
    %v2439 = vld [vmem:[#allocation7 + $0x178] sm:$0xf]
    %v2440 = vld [vmem:[#allocation7 + $0x17c] sm:$0xf]
    %v2441 = vld [vmem:[%s8] sm:$0x1]
    %v2443 = vlaneseq
    %v2444 = vshrl.u32 %v2443, 7
    %v2445 = vsub.s32 0, %v2444
    %v2446 = vrot.slane %v2441, %v2445
    %v2544 = vunpack.c.l.b16 %v2345
    %v2545 = vunpack.c.l.b16 %v2346
    %v2546 = vunpack.c.l.b16 %v2347
    %v2547 = vunpack.c.l.b16 %v2348
    %v2548 = vunpack.c.l.b16 %v2349
    %v2549 = vunpack.c.l.b16 %v2350
    %v2550 = vunpack.c.l.b16 %v2351
    %v2551 = vunpack.c.l.b16 %v2352
    %v2552 = vunpack.c.l.b16 %v2353
    %v2553 = vunpack.c.l.b16 %v2354
    %v2554 = vunpack.c.l.b16 %v2355
    %v2555 = vunpack.c.l.b16 %v2356
    %v2556 = vunpack.c.l.b16 %v2357
    %v2557 = vunpack.c.l.b16 %v2358
    %v2558 = vunpack.c.l.b16 %v2359
    %v2559 = vunpack.c.l.b16 %v2360
    %v2560 = vunpack.c.l.b16 %v2361
    %v2561 = vunpack.c.l.b16 %v2362
    %v2562 = vunpack.c.l.b16 %v2363
    %v2563 = vunpack.c.l.b16 %v2364
    %v2564 = vunpack.c.l.b16 %v2365
    %v2565 = vunpack.c.l.b16 %v2366
    %v2566 = vunpack.c.l.b16 %v2367
    %v2567 = vunpack.c.l.b16 %v2368
    %v2568 = vunpack.c.l.b16 %v2369
    %v2569 = vunpack.c.l.b16 %v2370
    %v2570 = vunpack.c.l.b16 %v2371
    %v2571 = vunpack.c.l.b16 %v2372
    %v2572 = vunpack.c.l.b16 %v2373
    %v2573 = vunpack.c.l.b16 %v2374
    %v2574 = vunpack.c.l.b16 %v2375
    %v2575 = vunpack.c.l.b16 %v2376
    %v2576 = vunpack.c.l.b16 %v2377
    %v2577 = vunpack.c.l.b16 %v2378
    %v2578 = vunpack.c.l.b16 %v2379
    %v2579 = vunpack.c.l.b16 %v2380
    %v2580 = vunpack.c.l.b16 %v2381
    %v2581 = vunpack.c.l.b16 %v2382
    %v2582 = vunpack.c.l.b16 %v2383
    %v2583 = vunpack.c.l.b16 %v2384
    %v2584 = vunpack.c.l.b16 %v2385
    %v2585 = vunpack.c.l.b16 %v2386
    %v2586 = vunpack.c.l.b16 %v2387
    %v2587 = vunpack.c.l.b16 %v2388
    %v2588 = vunpack.c.l.b16 %v2389
    %v2589 = vunpack.c.l.b16 %v2390
    %v2590 = vunpack.c.l.b16 %v2391
    %v2591 = vunpack.c.l.b16 %v2392
    %v2592 = vunpack.c.l.b16 %v2393
    %v2593 = vunpack.c.l.b16 %v2394
    %v2594 = vunpack.c.l.b16 %v2395
    %v2595 = vunpack.c.l.b16 %v2396
    %v2596 = vunpack.c.l.b16 %v2397
    %v2597 = vunpack.c.l.b16 %v2398
    %v2598 = vunpack.c.l.b16 %v2399
    %v2599 = vunpack.c.l.b16 %v2400
    %v2600 = vunpack.c.l.b16 %v2401
    %v2601 = vunpack.c.l.b16 %v2402
    %v2602 = vunpack.c.l.b16 %v2403
    %v2603 = vunpack.c.l.b16 %v2404
    %v2604 = vunpack.c.l.b16 %v2405
    %v2605 = vunpack.c.l.b16 %v2406
    %v2606 = vunpack.c.l.b16 %v2407
    %v2607 = vunpack.c.l.b16 %v2408
    %v2608 = vunpack.c.l.b16 %v2409
    %v2609 = vunpack.c.l.b16 %v2410
    %v2610 = vunpack.c.l.b16 %v2411
    %v2611 = vunpack.c.l.b16 %v2412
    %v2612 = vunpack.c.l.b16 %v2413
    %v2613 = vunpack.c.l.b16 %v2414
    %v2614 = vunpack.c.l.b16 %v2415
    %v2615 = vunpack.c.l.b16 %v2416
    %v2616 = vunpack.c.l.b16 %v2417
    %v2617 = vunpack.c.l.b16 %v2418
    %v2618 = vunpack.c.l.b16 %v2419
    %v2619 = vunpack.c.l.b16 %v2420
    %v2620 = vunpack.c.l.b16 %v2421
    %v2621 = vunpack.c.l.b16 %v2422
    %v2622 = vunpack.c.l.b16 %v2423
    %v2623 = vunpack.c.l.b16 %v2424
    %v2624 = vunpack.c.l.b16 %v2425
    %v2625 = vunpack.c.l.b16 %v2426
    %v2626 = vunpack.c.l.b16 %v2427
    %v2627 = vunpack.c.l.b16 %v2428
    %v2628 = vunpack.c.l.b16 %v2429
    %v2629 = vunpack.c.l.b16 %v2430
    %v2630 = vunpack.c.l.b16 %v2431
    %v2631 = vunpack.c.l.b16 %v2432
    %v2632 = vunpack.c.l.b16 %v2433
    %v2633 = vunpack.c.l.b16 %v2434
    %v2634 = vunpack.c.l.b16 %v2435
    %v2635 = vunpack.c.l.b16 %v2436
    %v2636 = vunpack.c.l.b16 %v2437
    %v2637 = vunpack.c.l.b16 %v2438
    %v2638 = vunpack.c.l.b16 %v2439
    %v2639 = vunpack.c.l.b16 %v2440
    %v2640 = vpack.c.b16 %v2545, %v2544
    %v2641 = vpack.c.b16 %v2547, %v2546
    %v2642 = vpack.c.b16 %v2549, %v2548
    %v2643 = vpack.c.b16 %v2551, %v2550
    %v2644 = vpack.c.b16 %v2553, %v2552
    %v2645 = vpack.c.b16 %v2555, %v2554
    %v2646 = vpack.c.b16 %v2557, %v2556
    %v2647 = vpack.c.b16 %v2559, %v2558
    %v2648 = vpack.c.b16 %v2561, %v2560
    %v2649 = vpack.c.b16 %v2563, %v2562
    %v2650 = vpack.c.b16 %v2565, %v2564
    %v2651 = vpack.c.b16 %v2567, %v2566
    %v2652 = vpack.c.b16 %v2569, %v2568
    %v2653 = vpack.c.b16 %v2571, %v2570
    %v2654 = vpack.c.b16 %v2573, %v2572
    %v2655 = vpack.c.b16 %v2575, %v2574
    %v2656 = vpack.c.b16 %v2577, %v2576
    %v2657 = vpack.c.b16 %v2579, %v2578
    %v2658 = vpack.c.b16 %v2581, %v2580
    %v2659 = vpack.c.b16 %v2583, %v2582
    %v2660 = vpack.c.b16 %v2585, %v2584
    %v2661 = vpack.c.b16 %v2587, %v2586
    %v2662 = vpack.c.b16 %v2589, %v2588
    %v2663 = vpack.c.b16 %v2591, %v2590
    %v2664 = vpack.c.b16 %v2593, %v2592
    %v2665 = vpack.c.b16 %v2595, %v2594
    %v2666 = vpack.c.b16 %v2597, %v2596
    %v2667 = vpack.c.b16 %v2599, %v2598
    %v2668 = vpack.c.b16 %v2601, %v2600
    %v2669 = vpack.c.b16 %v2603, %v2602
    %v2670 = vpack.c.b16 %v2605, %v2604
    %v2671 = vpack.c.b16 %v2607, %v2606
    %v2672 = vpack.c.b16 %v2609, %v2608
    %v2673 = vpack.c.b16 %v2611, %v2610
    %v2674 = vpack.c.b16 %v2613, %v2612
    %v2675 = vpack.c.b16 %v2615, %v2614
    %v2676 = vpack.c.b16 %v2617, %v2616
    %v2677 = vpack.c.b16 %v2619, %v2618
    %v2678 = vpack.c.b16 %v2621, %v2620
    %v2679 = vpack.c.b16 %v2623, %v2622
    %v2680 = vpack.c.b16 %v2625, %v2624
    %v2681 = vpack.c.b16 %v2627, %v2626
    %v2682 = vpack.c.b16 %v2629, %v2628
    %v2683 = vpack.c.b16 %v2631, %v2630
    %v2684 = vpack.c.b16 %v2633, %v2632
    %v2685 = vpack.c.b16 %v2635, %v2634
    %v2686 = vpack.c.b16 %v2637, %v2636
    %v2687 = vpack.c.b16 %v2639, %v2638
    %2736 = vmatprep.subr.bf16.mxu0 0
    %2737 = vmatpush1.bf16.msra.mxu0 %v2640
    %2738 = vmatprep.subr.bf16.mxu0 0
    %2739 = vmatpush1.bf16.msra.mxu0 %v2641
    %2740 = vmatprep.subr.bf16.mxu0 0
    %2741 = vmatpush1.bf16.msra.mxu0 %v2642
    %2742 = vmatprep.subr.bf16.mxu0 0
    %2743 = vmatpush1.bf16.msra.mxu0 %v2643
    %2744 = vmatprep.subr.bf16.mxu0 0
    %2745 = vmatpush1.bf16.msra.mxu0 %v2644
    %2746 = vmatprep.subr.bf16.mxu0 0
    %2747 = vmatpush1.bf16.msra.mxu0 %v2645
    %2748 = vmatprep.subr.bf16.mxu0 0
    %2749 = vmatpush1.bf16.msra.mxu0 %v2646
    %2750 = vmatprep.subr.bf16.mxu0 0
    %2751 = vmatpush1.bf16.msra.mxu0 %v2647
    %2752 = vmatprep.subr.bf16.mxu0 0
    %2753 = vmatpush1.bf16.msra.mxu0 %v2648
    %2754 = vmatprep.subr.bf16.mxu0 0
    %2755 = vmatpush1.bf16.msra.mxu0 %v2649
    %2756 = vmatprep.subr.bf16.mxu0 0
    %2757 = vmatpush1.bf16.msra.mxu0 %v2650
    %2758 = vmatprep.subr.bf16.mxu0 0
    %2759 = vmatpush1.bf16.msra.mxu0 %v2651
    %2760 = vmatprep.subr.bf16.mxu0 0
    %2761 = vmatpush1.bf16.msra.mxu0 %v2652
    %2762 = vmatprep.subr.bf16.mxu0 0
    %2763 = vmatpush1.bf16.msra.mxu0 %v2653
    %2764 = vmatprep.subr.bf16.mxu0 0
    %2765 = vmatpush1.bf16.msra.mxu0 %v2654
    %2766 = vmatprep.subr.bf16.mxu0 0
    %2767 = vmatpush1.bf16.msra.mxu0 %v2655
    %2768 = vmatprep.mubr.bf16.mxu0 %v1518
    %2769 = vmatmul.mubr.bf16.gmra.mrb[0].mxu0 %v1517
    %v2770 = vpop.f32.mrb[0].mxu0
    %v2771 = vadd.f32 %v2446, %v2770
    %v2772 = vpop.f32.mrb[0].mxu0
    %v2773 = vpop.f32.mrb[0].mxu0
    %v2774 = vpop.f32.mrb[0].mxu0
    %2775 = vdwg.mxu0
    %2776 = vmatprep.subr.bf16.mxu0 0
    %2777 = vmatpush1.bf16.msra.mxu0 %v2656
    %2778 = vmatprep.subr.bf16.mxu0 0
    %2779 = vmatpush1.bf16.msra.mxu0 %v2657
    %2780 = vmatprep.subr.bf16.mxu0 0
    %2781 = vmatpush1.bf16.msra.mxu0 %v2658
    %2782 = vmatprep.subr.bf16.mxu0 0
    %2783 = vmatpush1.bf16.msra.mxu0 %v2659
    %2784 = vmatprep.subr.bf16.mxu0 0
    %2785 = vmatpush1.bf16.msra.mxu0 %v2660
    %2786 = vmatprep.subr.bf16.mxu0 0
    %2787 = vmatpush1.bf16.msra.mxu0 %v2661
    %2788 = vmatprep.subr.bf16.mxu0 0
    %2789 = vmatpush1.bf16.msra.mxu0 %v2662
    %2790 = vmatprep.subr.bf16.mxu0 0
    %2791 = vmatpush1.bf16.msra.mxu0 %v2663
    %2792 = vmatprep.subr.bf16.mxu0 0
    %2793 = vmatpush1.bf16.msra.mxu0 %v2664
    %2794 = vmatprep.subr.bf16.mxu0 0
    %2795 = vmatpush1.bf16.msra.mxu0 %v2665
    %2796 = vmatprep.subr.bf16.mxu0 0
    %2797 = vmatpush1.bf16.msra.mxu0 %v2666
    %2798 = vmatprep.subr.bf16.mxu0 0
    %2799 = vmatpush1.bf16.msra.mxu0 %v2667
    %2800 = vmatprep.subr.bf16.mxu0 0
    %2801 = vmatpush1.bf16.msra.mxu0 %v2668
    %2802 = vmatprep.subr.bf16.mxu0 0
    %2803 = vmatpush1.bf16.msra.mxu0 %v2669
    %2804 = vmatprep.subr.bf16.mxu0 0
    %2805 = vmatpush1.bf16.msra.mxu0 %v2670
    %2806 = vmatprep.subr.bf16.mxu0 0
    %2807 = vmatpush1.bf16.msra.mxu0 %v2671
    %2808 = vmatprep.mubr.bf16.mxu0 %v2342
    %2809 = vmatmul.mubr.bf16.gmra.mrb[0].mxu0 %v1519
    %v2810 = vpop.f32.mrb[0].mxu0
    %v2811 = vadd.f32 %v2771, %v2810
    %v2812 = vpop.f32.mrb[0].mxu0
    %v2813 = vpop.f32.mrb[0].mxu0
    %v2814 = vpop.f32.mrb[0].mxu0
    %2815 = vdwg.mxu0
    %2816 = vmatprep.subr.bf16.mxu0 0
    %2817 = vmatpush1.bf16.msra.mxu0 %v2672
    %2818 = vmatprep.subr.bf16.mxu0 0
    %2819 = vmatpush1.bf16.msra.mxu0 %v2673
    %2820 = vmatprep.subr.bf16.mxu0 0
    %2821 = vmatpush1.bf16.msra.mxu0 %v2674
    %2822 = vmatprep.subr.bf16.mxu0 0
    %2823 = vmatpush1.bf16.msra.mxu0 %v2675
    %2824 = vmatprep.subr.bf16.mxu0 0
    %2825 = vmatpush1.bf16.msra.mxu0 %v2676
    %2826 = vmatprep.subr.bf16.mxu0 0
    %2827 = vmatpush1.bf16.msra.mxu0 %v2677
    %2828 = vmatprep.subr.bf16.mxu0 0
    %2829 = vmatpush1.bf16.msra.mxu0 %v2678
    %2830 = vmatprep.subr.bf16.mxu0 0
    %2831 = vmatpush1.bf16.msra.mxu0 %v2679
    %2832 = vmatprep.subr.bf16.mxu0 0
    %2833 = vmatpush1.bf16.msra.mxu0 %v2680
    %2834 = vmatprep.subr.bf16.mxu0 0
    %2835 = vmatpush1.bf16.msra.mxu0 %v2681
    %2836 = vmatprep.subr.bf16.mxu0 0
    %2837 = vmatpush1.bf16.msra.mxu0 %v2682
    %2838 = vmatprep.subr.bf16.mxu0 0
    %2839 = vmatpush1.bf16.msra.mxu0 %v2683
    %2840 = vmatprep.subr.bf16.mxu0 0
    %2841 = vmatpush1.bf16.msra.mxu0 %v2684
    %2842 = vmatprep.subr.bf16.mxu0 0
    %2843 = vmatpush1.bf16.msra.mxu0 %v2685
    %2844 = vmatprep.subr.bf16.mxu0 0
    %2845 = vmatpush1.bf16.msra.mxu0 %v2686
    %2846 = vmatprep.subr.bf16.mxu0 0
    %2847 = vmatpush1.bf16.msra.mxu0 %v2687
    %2848 = vmatprep.mubr.bf16.mxu0 %v2344
    %2849 = vmatmul.mubr.bf16.gmra.mrb[0].mxu0 %v2343
    %v2850 = vpop.f32.mrb[0].mxu0
    %v2851 = vadd.f32 %v2811, %v2850
    %v2852 = vpop.f32.mrb[0].mxu0
    %v2853 = vpop.f32.mrb[0].mxu0
    %v2854 = vpop.f32.mrb[0].mxu0
    %2855 = vdwg.mxu0
    %2856 = vst [vmem:[%s9] sm:$0xff] %v2851
    // Predicated region
    $region54: #{_critic_forward.1} parent=1 // pred_check
      _
    $region55: #{_critic_forward.1} parent=1 // pred_check_branch
      %2858 = sbr.rel (0) target = $region57
    $region56: #{_critic_forward.1} parent=1 // pred_region
      _
    $region57: #{_critic_forward.1} parent=1 // pred_fallthru
      _
    // Predicated region
    $region58: #{_critic_forward.1} parent=1 // pred_check
      _
    $region59: #{_critic_forward.1} parent=1 // pred_check_branch
      %2860 = sbr.rel (0) target = $region61
    $region60: #{_critic_forward.1} parent=1 // pred_region
      _
    $region61: #{_critic_forward.1} parent=1 // pred_fallthru
      _
    %2861 = vsyncpa [#allocation3], 1
    %2862 = vsyncpa [#allocation5], 1
    %2863 = vsyncpa [#allocation8], 1

</llo_original>
